<compile_context>
chip_gen: v7x
topology: tpu7x:2x2x1
jax: 0.10.0
libtpu: 0.0.40
codegen_flags: <defaults>
</compile_context>

<pallas_src>
import functools

import jax
import jax.numpy as jnp
import numpy as np
from jax.experimental import pallas as pl
from jax.experimental.pallas import tpu as pltpu

# -----------------------------------------------------------------------------
# Problem sizes (consistent with the module: channels % reduction_ratio == 0)
# -----------------------------------------------------------------------------
B = 2
C = 32
RED = 16
CR = C // RED          # 2
NUM_PATHS = 4
H = W = 8
HW = H * W


# -----------------------------------------------------------------------------
# Pallas kernel: one invocation processes the whole batch.
#   x_ref    : (B*C, HW)  activations in native NCHW order (channel-major)
#   slab_ref : (R, 5C)    fused parameter slab (see pack_params for layout)
#   o_ref    : (B*C, HW)  output in native NCHW order
# -----------------------------------------------------------------------------
def _multipath_attn_kernel(x_ref, slab_ref, o_ref, *, nb, hw, c, hpad):
    c5 = 5 * c

    # ---- unpack the fused parameter slab (all row offsets are multiples of 8)
    w1_full   = slab_ref[0:c, :]                       # (c, c5)   lanes >= hidden are 0
    w2        = slab_ref[c:c + hpad, :]                # (hpad, c5) block-diagonal layer-2
    r         = c + hpad
    wfc1_a    = slab_ref[r:r + c5, :]                  # (c5, c5)  fc1 rows for avg feats
    wfc1_m    = slab_ref[r + c5:r + 2 * c5, :]         # (c5, c5)  fc1 rows for max feats
    wfc2_full = slab_ref[r + 2 * c5:r + 3 * c5, :]     # (c5, c5)  lanes >= c are 0
    bias      = slab_ref[r + 3 * c5:r + 3 * c5 + 8, :] # (8, c5)   bias rows

    w1   = w1_full[:, 0:hpad]                          # (c, hpad)
    wfc2 = wfc2_full[:, 0:c]                           # (c5, c)
    b1   = bias[0:1, 0:hpad]                           # (1, hpad)  padded entries are 0
    b2   = bias[1:2, :]                                # (1, c5)
    bfc1 = bias[2:3, :]                                # (1, c5)
    bfc2 = bias[3:4, 0:c]                              # (1, c)

    x = x_ref[...]                                     # (nb*c, hw), channel-major

    # Bias broadcasts hoisted once (JAX does not CSE broadcast_in_dim in loops).
    b1_b = jnp.broadcast_to(b1, (hw, hpad))
    b2_b = jnp.broadcast_to(b2, (hw, c5))

    # ---- fused shared + path MLPs: 2 MXU matmuls per batch -------------------
    paths = []                                         # row-major (hw, c5) per batch
    for bi in range(nb):                               # nb is tiny & static
        x_cm = x[bi * c:(bi + 1) * c, :]               # (c, hw)   aligned sublane slice
        x_rm = jnp.transpose(x_cm)                     # (hw, c)   tiny in-kernel XLU flip
        h = jnp.maximum(
            jnp.dot(x_rm, w1, preferred_element_type=jnp.float32) + b1_b, 0.0)
        p = jnp.dot(h, w2, preferred_element_type=jnp.float32) + b2_b   # (hw, c5)
        paths.append(p)    # lane blocks: [shared | path0 | path1 | path2 | path3]

    # ---- adaptive avg / max pooling over the spatial rows, per batch ---------
    avg_all = jnp.concatenate(
        [jnp.mean(p, axis=0, keepdims=True) for p in paths], axis=0)    # (nb, c5)
    max_all = jnp.concatenate(
        [jnp.max(p, axis=0, keepdims=True) for p in paths], axis=0)     # (nb, c5)

    # ---- channel attention: fc([avg | max]) as a split matmul ----------------
    hfc = jnp.maximum(
        jnp.dot(avg_all, wfc1_a, preferred_element_type=jnp.float32)
        + jnp.dot(max_all, wfc1_m, preferred_element_type=jnp.float32)
        + bfc1,
        0.0,
    )                                                                   # (nb, c5)
    ch = jax.nn.sigmoid(
        jnp.dot(hfc, wfc2, preferred_element_type=jnp.float32) + bfc2)  # (nb, c)

    # ---- spatial attention + final scaling; one full-block store -------------
    outs = []
    for bi in range(nb):
        shared = paths[bi][:, 0:c]                                       # (hw, c)
        sp = jax.nn.sigmoid(jnp.mean(shared, axis=1, keepdims=True))     # (hw, 1)
        out_rm = ch[bi:bi + 1, :] * shared * sp                          # (hw, c)
        outs.append(jnp.transpose(out_rm))                               # (c, hw)
    o_ref[...] = jnp.concatenate(outs, axis=0).astype(o_ref.dtype)       # (nb*c, hw)


# -----------------------------------------------------------------------------
# One-time parameter packing: 12 tensors -> 1 slab of shape (C + hpad + 3*5C + 8, 5C)
#   rows [0, C)            layer-1 weights  [shared | path0..3]   (lanes 0:hidden)
#   rows [C, C+hpad)       block-diagonal layer-2 weights
#   next 5C rows           fc1 weights for the avg features
#   next 5C rows           fc1 weights for the max features
#   next 5C rows           fc2 weights (lanes 0:C)
#   last 8 rows            bias rows [b1 | b2 | bfc1 | bfc2 | 0...]
# -----------------------------------------------------------------------------
def pack_params(p):
    cr = C // RED
    hidden = (NUM_PATHS + 1) * cr                       # 10
    hpad = ((hidden + 7) // 8) * 8                      # 16
    c5 = 5 * C
    assert C % RED == 0 and C % 8 == 0 and hpad % 8 == 0 and hidden <= hpad

    # layer-1 weights concatenated along the hidden axis (padded lanes stay 0).
    w1_all = jnp.concatenate(
        [p["w1s"]] + [p["wp1"][i] for i in range(NUM_PATHS)], axis=1)    # (C, hidden)
    w1_blk = jnp.zeros((C, c5), jnp.float32).at[:, :hidden].set(w1_all)

    # layer-2 weights as a block-diagonal matrix (padded rows stay 0).
    blocks = [p["w2s"]] + [p["wp2"][i] for i in range(NUM_PATHS)]
    w2_blk = jnp.zeros((hpad, c5), jnp.float32)
    for i, blk in enumerate(blocks):
        w2_blk = w2_blk.at[i * cr:(i + 1) * cr, i * C:(i + 1) * C].set(blk)

    wfc1_a = p["wfc1"][:c5, :]                          # (5C, 5C)
    wfc1_m = p["wfc1"][c5:, :]                          # (5C, 5C)
    wfc2_blk = jnp.zeros((c5, c5), jnp.float32).at[:, :C].set(p["wfc2"])

    # bias rows, padded to full lane width; padded entries MUST stay exactly 0.
    b1_all = jnp.concatenate(
        [p["b1s"]] + [p["bp1"][i] for i in range(NUM_PATHS)], axis=1)    # (1, hidden)
    b2_all = jnp.concatenate(
        [p["b2s"]] + [p["bp2"][i] for i in range(NUM_PATHS)], axis=1)    # (1, 5C)
    bias_blk = jnp.zeros((8, c5), jnp.float32)
    bias_blk = bias_blk.at[0, :hidden].set(b1_all[0])
    bias_blk = bias_blk.at[1, :].set(b2_all[0])
    bias_blk = bias_blk.at[2, :].set(p["bfc1"][0])
    bias_blk = bias_blk.at[3, :C].set(p["bfc2"][0])

    slab = jnp.concatenate(
        [w1_blk, w2_blk, wfc1_a, wfc1_m, wfc2_blk, bias_blk], axis=0)    # (R, 5C)
    assert slab.shape == (C + hpad + 3 * c5 + 8, c5)
    return slab


# -----------------------------------------------------------------------------
# Wrapper: NCHW in/out, single gridless pallas_call, whole arrays in VMEM.
# No wrapper-side transposes — only free reshapes.
# -----------------------------------------------------------------------------
@jax.jit
def multi_path_attn(x_nchw, slab):
    b, c, h, w = x_nchw.shape
    hw = h * w
    c5 = 5 * c
    hpad = slab.shape[0] - c - 3 * c5 - 8               # static (from shapes)

    x2 = x_nchw.reshape(b * c, hw)                       # free reshape (NCHW row-major)

    kernel = functools.partial(
        _multipath_attn_kernel, nb=b, hw=hw, c=c, hpad=hpad)
    vmem = pl.BlockSpec(memory_space=pltpu.MemorySpace.VMEM)

    out = pl.pallas_call(
        kernel,
        out_shape=jax.ShapeDtypeStruct((b * c, hw), x_nchw.dtype),
        in_specs=[vmem, vmem],
        out_specs=vmem,
    )(x2, slab)

    return out.reshape(b, c, h, w)                       # free reshape


# -----------------------------------------------------------------------------
# Pure-JAX reference (uses the original, unfused weights) for correctness.
# -----------------------------------------------------------------------------
def _ref_forward(x_nchw, p):
    b, c, h, w = x_nchw.shape
    x = jnp.transpose(x_nchw, (0, 2, 3, 1)).reshape(b, h * w, c)

    def mlp(xf, w1, b1, w2, b2):
        hdn = jnp.maximum(xf @ w1 + b1, 0.0)
        return hdn @ w2 + b2

    shared = mlp(x, p["w1s"], p["b1s"], p["w2s"], p["b2s"])
    avg_f = [shared.mean(axis=1)]
    max_f = [shared.max(axis=1)]
    for i in range(NUM_PATHS):
        po = mlp(x, p["wp1"][i], p["bp1"][i], p["wp2"][i], p["bp2"][i])
        avg_f.append(po.mean(axis=1))
        max_f.append(po.max(axis=1))
    a = jnp.concatenate(avg_f + max_f, axis=-1)                       # (B, 10C)
    hfc = jnp.maximum(a @ p["wfc1"] + p["bfc1"], 0.0)
    ch = jax.nn.sigmoid(hfc @ p["wfc2"] + p["bfc2"])                  # (B, C)
    sp = jax.nn.sigmoid(shared.mean(axis=-1, keepdims=True))          # (B, HW, 1)
    out = ch[:, None, :] * shared * sp
    return jnp.transpose(out.reshape(b, h, w, c), (0, 3, 1, 2))


# -----------------------------------------------------------------------------
# Deterministic parameter init + run.
# -----------------------------------------------------------------------------
def _init_params(key):
    ks = jax.random.split(key, 12)
    s = 0.1
    return {
        "w1s": jax.random.normal(ks[0], (C, CR), jnp.float32) * s,
        "b1s": jax.random.normal(ks[1], (1, CR), jnp.float32) * s,
        "w2s": jax.random.normal(ks[2], (CR, C), jnp.float32) * s,
        "b2s": jax.random.normal(ks[3], (1, C), jnp.float32) * s,
        "wp1": jax.random.normal(ks[4], (NUM_PATHS, C, CR), jnp.float32) * s,
        "bp1": jax.random.normal(ks[5], (NUM_PATHS, 1, CR), jnp.float32) * s,
        "wp2": jax.random.normal(ks[6], (NUM_PATHS, CR, C), jnp.float32) * s,
        "bp2": jax.random.normal(ks[7], (NUM_PATHS, 1, C), jnp.float32) * s,
        "wfc1": jax.random.normal(ks[8], (10 * C, 5 * C), jnp.float32) * s,
        "bfc1": jax.random.normal(ks[9], (1, 5 * C), jnp.float32) * s,
        "wfc2": jax.random.normal(ks[10], (5 * C, C), jnp.float32) * s,
        "bfc2": jax.random.normal(ks[11], (1, C), jnp.float32) * s,
    }


if __name__ == "__main__":
    key = jax.random.PRNGKey(0)
    kx, kp = jax.random.split(key)
    x = jax.random.normal(kx, (B, C, H, W), jnp.float32)
    params = _init_params(kp)
    slab = pack_params(params)            # done once, outside the per-call jit

    out = multi_path_attn(x, slab)
    out = jax.block_until_ready(out)

    ref = jax.block_until_ready(_ref_forward(x, params))
    assert out.shape == (B, C, H, W)
    np.testing.assert_allclose(np.asarray(out), np.asarray(ref),
                               rtol=1e-4, atol=1e-5)
    print("KERNEL_OK")
</pallas_src>

<mosaic_0001>
module attributes {stable_mosaic.version = 11 : i64} {
  func.func @_multipath_attn_kernel(%arg0: memref<64x64xf32, #tpu.memory_space<vmem>>, %arg1: memref<536x160xf32, #tpu.memory_space<vmem>>, %arg2: memref<64x64xf32, #tpu.memory_space<vmem>>) attributes {dimension_semantics = [], scalar_prefetch = 0 : i64, scratch_operands = 0 : i64, tpu.core_type = #tpu.core_type<tc>} {
    %c0 = arith.constant 0 : index
    %c0_0 = arith.constant 0 : index
    %0 = vector.load %arg1[%c0, %c0_0] : memref<536x160xf32, #tpu.memory_space<vmem>>, vector<32x160xf32>
    %c32 = arith.constant 32 : index
    %c0_1 = arith.constant 0 : index
    %1 = vector.load %arg1[%c32, %c0_1] : memref<536x160xf32, #tpu.memory_space<vmem>>, vector<16x160xf32>
    %c48 = arith.constant 48 : index
    %c0_2 = arith.constant 0 : index
    %2 = vector.load %arg1[%c48, %c0_2] : memref<536x160xf32, #tpu.memory_space<vmem>>, vector<160x160xf32>
    %c208 = arith.constant 208 : index
    %c0_3 = arith.constant 0 : index
    %3 = vector.load %arg1[%c208, %c0_3] : memref<536x160xf32, #tpu.memory_space<vmem>>, vector<160x160xf32>
    %c368 = arith.constant 368 : index
    %c0_4 = arith.constant 0 : index
    %4 = vector.load %arg1[%c368, %c0_4] : memref<536x160xf32, #tpu.memory_space<vmem>>, vector<160x160xf32>
    %c528 = arith.constant 528 : index
    %c0_5 = arith.constant 0 : index
    %5 = vector.load %arg1[%c528, %c0_5] : memref<536x160xf32, #tpu.memory_space<vmem>>, vector<8x160xf32>
    %6 = vector.extract_strided_slice %0 {offsets = [0, 0], sizes = [32, 16], strides = [1, 1]} : vector<32x160xf32> to vector<32x16xf32>
    %7 = vector.extract_strided_slice %4 {offsets = [0, 0], sizes = [160, 32], strides = [1, 1]} : vector<160x160xf32> to vector<160x32xf32>
    %8 = vector.extract_strided_slice %5 {offsets = [0, 0], sizes = [1, 16], strides = [1, 1]} : vector<8x160xf32> to vector<1x16xf32>
    %9 = vector.extract_strided_slice %5 {offsets = [1, 0], sizes = [1, 160], strides = [1, 1]} : vector<8x160xf32> to vector<1x160xf32>
    %10 = vector.extract_strided_slice %5 {offsets = [2, 0], sizes = [1, 160], strides = [1, 1]} : vector<8x160xf32> to vector<1x160xf32>
    %11 = vector.extract_strided_slice %5 {offsets = [3, 0], sizes = [1, 32], strides = [1, 1]} : vector<8x160xf32> to vector<1x32xf32>
    %c0_6 = arith.constant 0 : index
    %c0_7 = arith.constant 0 : index
    %12 = vector.load %arg0[%c0_6, %c0_7] : memref<64x64xf32, #tpu.memory_space<vmem>>, vector<64x64xf32>
    %13 = vector.shape_cast %8 : vector<1x16xf32> to vector<1x16xf32>
    %14 = vector.broadcast %13 : vector<1x16xf32> to vector<64x16xf32>
    %15 = vector.shape_cast %9 : vector<1x160xf32> to vector<1x160xf32>
    %16 = vector.broadcast %15 : vector<1x160xf32> to vector<64x160xf32>
    %17 = vector.extract_strided_slice %12 {offsets = [0, 0], sizes = [32, 64], strides = [1, 1]} : vector<64x64xf32> to vector<32x64xf32>
    %18 = tpu.transpose %17, [1, 0] : vector<32x64xf32> -> vector<64x32xf32>
    %cst = arith.constant dense<0.000000e+00> : vector<64x16xf32>
    %19 = tpu.matmul %18, %6, %cst {dimension_numbers = #tpu.dot_dimension_numbers<[1], [0], [0], [1], [0, 0, 1, 1], [], []>} : vector<64x32xf32>, vector<32x16xf32>, vector<64x16xf32> -> vector<64x16xf32>
    %20 = arith.addf %19, %14 : vector<64x16xf32>
    %cst_8 = arith.constant 0.000000e+00 : f32
    %21 = vector.broadcast %cst_8 : f32 to vector<64x16xf32>
    %22 = arith.maximumf %20, %21 : vector<64x16xf32>
    %cst_9 = arith.constant dense<0.000000e+00> : vector<64x160xf32>
    %23 = tpu.matmul %22, %1, %cst_9 {dimension_numbers = #tpu.dot_dimension_numbers<[1], [0], [0], [1], [0, 0, 1, 1], [], []>} : vector<64x16xf32>, vector<16x160xf32>, vector<64x160xf32> -> vector<64x160xf32>
    %24 = arith.addf %23, %16 : vector<64x160xf32>
    %25 = vector.extract_strided_slice %12 {offsets = [32, 0], sizes = [32, 64], strides = [1, 1]} : vector<64x64xf32> to vector<32x64xf32>
    %26 = tpu.transpose %25, [1, 0] : vector<32x64xf32> -> vector<64x32xf32>
    %cst_10 = arith.constant dense<0.000000e+00> : vector<64x16xf32>
    %27 = tpu.matmul %26, %6, %cst_10 {dimension_numbers = #tpu.dot_dimension_numbers<[1], [0], [0], [1], [0, 0, 1, 1], [], []>} : vector<64x32xf32>, vector<32x16xf32>, vector<64x16xf32> -> vector<64x16xf32>
    %28 = arith.addf %27, %14 : vector<64x16xf32>
    %cst_11 = arith.constant 0.000000e+00 : f32
    %29 = vector.broadcast %cst_11 : f32 to vector<64x16xf32>
    %30 = arith.maximumf %28, %29 : vector<64x16xf32>
    %cst_12 = arith.constant dense<0.000000e+00> : vector<64x160xf32>
    %31 = tpu.matmul %30, %1, %cst_12 {dimension_numbers = #tpu.dot_dimension_numbers<[1], [0], [0], [1], [0, 0, 1, 1], [], []>} : vector<64x16xf32>, vector<16x160xf32>, vector<64x160xf32> -> vector<64x160xf32>
    %32 = arith.addf %31, %16 : vector<64x160xf32>
    %cst_13 = arith.constant dense<0.000000e+00> : vector<160xf32>
    %33 = vector.multi_reduction <add>, %24, %cst_13 [0] : vector<64x160xf32> to vector<160xf32>
    %34 = vector.shape_cast %33 : vector<160xf32> to vector<1x160xf32>
    %cst_14 = arith.constant 6.400000e+01 : f32
    %35 = vector.broadcast %cst_14 : f32 to vector<1x160xf32>
    %36 = arith.divf %34, %35 : vector<1x160xf32>
    %cst_15 = arith.constant dense<0.000000e+00> : vector<160xf32>
    %37 = vector.multi_reduction <add>, %32, %cst_15 [0] : vector<64x160xf32> to vector<160xf32>
    %38 = vector.shape_cast %37 : vector<160xf32> to vector<1x160xf32>
    %cst_16 = arith.constant 6.400000e+01 : f32
    %39 = vector.broadcast %cst_16 : f32 to vector<1x160xf32>
    %40 = arith.divf %38, %39 : vector<1x160xf32>
    %41 = tpu.concatenate %36, %40 in 0 : vector<1x160xf32>, vector<1x160xf32> -> vector<2x160xf32>
    %cst_17 = arith.constant dense<0xFF800000> : vector<160xf32>
    %42 = vector.multi_reduction <maximumf>, %24, %cst_17 [0] : vector<64x160xf32> to vector<160xf32>
    %43 = vector.shape_cast %42 : vector<160xf32> to vector<1x160xf32>
    %cst_18 = arith.constant dense<0xFF800000> : vector<160xf32>
    %44 = vector.multi_reduction <maximumf>, %32, %cst_18 [0] : vector<64x160xf32> to vector<160xf32>
    %45 = vector.shape_cast %44 : vector<160xf32> to vector<1x160xf32>
    %46 = tpu.concatenate %43, %45 in 0 : vector<1x160xf32>, vector<1x160xf32> -> vector<2x160xf32>
    %cst_19 = arith.constant dense<0.000000e+00> : vector<2x160xf32>
    %47 = tpu.matmul %41, %2, %cst_19 {dimension_numbers = #tpu.dot_dimension_numbers<[1], [0], [0], [1], [0, 0, 1, 1], [], []>} : vector<2x160xf32>, vector<160x160xf32>, vector<2x160xf32> -> vector<2x160xf32>
    %cst_20 = arith.constant dense<0.000000e+00> : vector<2x160xf32>
    %48 = tpu.matmul %46, %3, %cst_20 {dimension_numbers = #tpu.dot_dimension_numbers<[1], [0], [0], [1], [0, 0, 1, 1], [], []>} : vector<2x160xf32>, vector<160x160xf32>, vector<2x160xf32> -> vector<2x160xf32>
    %49 = arith.addf %47, %48 : vector<2x160xf32>
    %50 = vector.broadcast %10 : vector<1x160xf32> to vector<2x160xf32>
    %51 = arith.addf %49, %50 : vector<2x160xf32>
    %cst_21 = arith.constant 0.000000e+00 : f32
    %52 = vector.broadcast %cst_21 : f32 to vector<2x160xf32>
    %53 = arith.maximumf %51, %52 : vector<2x160xf32>
    %cst_22 = arith.constant dense<0.000000e+00> : vector<2x32xf32>
    %54 = tpu.matmul %53, %7, %cst_22 {dimension_numbers = #tpu.dot_dimension_numbers<[1], [0], [0], [1], [0, 0, 1, 1], [], []>} : vector<2x160xf32>, vector<160x32xf32>, vector<2x32xf32> -> vector<2x32xf32>
    %55 = vector.broadcast %11 : vector<1x32xf32> to vector<2x32xf32>
    %56 = arith.addf %54, %55 : vector<2x32xf32>
    %57 = arith.negf %56 : vector<2x32xf32>
    %58 = math.exp %57 : vector<2x32xf32>
    %cst_23 = arith.constant 1.000000e+00 : f32
    %59 = vector.broadcast %cst_23 : f32 to vector<2x32xf32>
    %60 = arith.addf %59, %58 : vector<2x32xf32>
    %61 = arith.divf %59, %60 : vector<2x32xf32>
    %62 = vector.extract_strided_slice %24 {offsets = [0, 0], sizes = [64, 32], strides = [1, 1]} : vector<64x160xf32> to vector<64x32xf32>
    %cst_24 = arith.constant dense<0.000000e+00> : vector<64xf32>
    %63 = vector.multi_reduction <add>, %62, %cst_24 [1] : vector<64x32xf32> to vector<64xf32>
    %64 = vector.shape_cast %63 : vector<64xf32> to vector<64x1xf32>
    %cst_25 = arith.constant 3.200000e+01 : f32
    %65 = vector.broadcast %cst_25 : f32 to vector<64x1xf32>
    %66 = arith.divf %64, %65 : vector<64x1xf32>
    %67 = arith.negf %66 : vector<64x1xf32>
    %68 = math.exp %67 : vector<64x1xf32>
    %cst_26 = arith.constant 1.000000e+00 : f32
    %69 = vector.broadcast %cst_26 : f32 to vector<64x1xf32>
    %70 = arith.addf %69, %68 : vector<64x1xf32>
    %71 = arith.divf %69, %70 : vector<64x1xf32>
    %72 = vector.extract_strided_slice %61 {offsets = [0, 0], sizes = [1, 32], strides = [1, 1]} : vector<2x32xf32> to vector<1x32xf32>
    %73 = vector.broadcast %72 : vector<1x32xf32> to vector<64x32xf32>
    %74 = arith.mulf %73, %62 : vector<64x32xf32>
    %75 = vector.broadcast %71 : vector<64x1xf32> to vector<64x32xf32>
    %76 = arith.mulf %74, %75 : vector<64x32xf32>
    %77 = tpu.transpose %76, [1, 0] : vector<64x32xf32> -> vector<32x64xf32>
    %78 = vector.extract_strided_slice %32 {offsets = [0, 0], sizes = [64, 32], strides = [1, 1]} : vector<64x160xf32> to vector<64x32xf32>
    %cst_27 = arith.constant dense<0.000000e+00> : vector<64xf32>
    %79 = vector.multi_reduction <add>, %78, %cst_27 [1] : vector<64x32xf32> to vector<64xf32>
    %80 = vector.shape_cast %79 : vector<64xf32> to vector<64x1xf32>
    %cst_28 = arith.constant 3.200000e+01 : f32
    %81 = vector.broadcast %cst_28 : f32 to vector<64x1xf32>
    %82 = arith.divf %80, %81 : vector<64x1xf32>
    %83 = arith.negf %82 : vector<64x1xf32>
    %84 = math.exp %83 : vector<64x1xf32>
    %cst_29 = arith.constant 1.000000e+00 : f32
    %85 = vector.broadcast %cst_29 : f32 to vector<64x1xf32>
    %86 = arith.addf %85, %84 : vector<64x1xf32>
    %87 = arith.divf %85, %86 : vector<64x1xf32>
    %88 = vector.extract_strided_slice %61 {offsets = [1, 0], sizes = [1, 32], strides = [1, 1]} : vector<2x32xf32> to vector<1x32xf32>
    %89 = vector.broadcast %88 : vector<1x32xf32> to vector<64x32xf32>
    %90 = arith.mulf %89, %78 : vector<64x32xf32>
    %91 = vector.broadcast %87 : vector<64x1xf32> to vector<64x32xf32>
    %92 = arith.mulf %90, %91 : vector<64x32xf32>
    %93 = tpu.transpose %92, [1, 0] : vector<64x32xf32> -> vector<32x64xf32>
    %94 = tpu.concatenate %77, %93 in 0 : vector<32x64xf32>, vector<32x64xf32> -> vector<64x64xf32>
    %c0_30 = arith.constant 0 : index
    %c0_31 = arith.constant 0 : index
    %95 = vector.load %arg2[%c0_30, %c0_31] : memref<64x64xf32, #tpu.memory_space<vmem>>, vector<64x64xf32>
    tpu.vector_store %arg2[%c0_30, %c0_31], %94 {strides = array<i32>} : memref<64x64xf32, #tpu.memory_space<vmem>>, vector<64x64xf32>,
    return
  }
}

</mosaic_0001>

<llo_original>
// kernel: multi_path_attn.1
$region0: #{multi_path_attn.1}
  #allocation0 [shape = 'u32[]', space=smem, size = 0x4, offset = 0x4, fixed_abs, tag = 'smem constant byte address 0x4 - core index']
  #allocation1 [shape = 'u32[144,128]{1,0:T(1,128)}', space=vmem, size = 0x12000, scoped, tag = 'internal scratch']
  %s0 = inlined_call_operand.vmem [shape: f32[64,64], index: 0, kind: input, shape index: {}]
  %s1 = inlined_call_operand.vmem [shape: f32[536,160], index: 1, kind: input, shape index: {}]
  %s2 = inlined_call_operand.vmem [shape: f32[64,64], index: 2, kind: output, shape index: {}]
  %s3 = sld [smem:[#allocation0]]
  $region18: #{multi_path_attn.1} parent=0
    _
  %s5 = ssub.s32 1, %s3
  %s6 = scalar_select 0, %s5, %s3
  // Predicated region
  $region2: #{multi_path_attn.1} parent=0 // pred_check
    _
  $region3: #{multi_path_attn.1} parent=0 // pred_check_branch
    %8 = sbr.rel (0) target = $region5
  $region4: #{multi_path_attn.1} parent=0 // pred_region
    _
  $region5: #{multi_path_attn.1} parent=0 // pred_fallthru
    _
  // Predicated region
  $region6: #{multi_path_attn.1} parent=0 // pred_check
    _
  $region7: #{multi_path_attn.1} parent=0 // pred_check_branch
    %10 = sbr.rel (0) target = $region9
  $region8: #{multi_path_attn.1} parent=0 // pred_region
    _
  $region9: #{multi_path_attn.1} parent=0 // pred_fallthru
    _
  %v11 = vld [vmem:[%s1] sm:$0xff]
  %v12 = vld [vmem:[%s1 + $0x10] sm:$0xff]
  %v13 = vld [vmem:[%s1 + $0x20] sm:$0xff]
  %v14 = vld [vmem:[%s1 + $0x30] sm:$0xff]
  %v15 = vld [vmem:[%s1 + $0x40] sm:$0xff]
  %v16 = vld [vmem:[%s1 + $0x48] sm:$0xff]
  %v17 = vld [vmem:[%s1 + $0x50] sm:$0xff]
  %v18 = vld [vmem:[%s1 + $0x58] sm:$0xff]
  %v19 = vld [vmem:[%s1 + $0x60] sm:$0xff]
  %v20 = vld [vmem:[%s1 + $0x68] sm:$0xff]
  %v21 = vld [vmem:[%s1 + $0x70] sm:$0xff]
  %v22 = vld [vmem:[%s1 + $0x78] sm:$0xff]
  %v23 = vld [vmem:[%s1 + $0x80] sm:$0xff]
  %v24 = vld [vmem:[%s1 + $0x88] sm:$0xff]
  %v25 = vld [vmem:[%s1 + $0x90] sm:$0xff]
  %v26 = vld [vmem:[%s1 + $0x98] sm:$0xff]
  %v27 = vld [vmem:[%s1 + $0xa0] sm:$0xff]
  %v28 = vld [vmem:[%s1 + $0xa8] sm:$0xff]
  %v29 = vld [vmem:[%s1 + $0xb0] sm:$0xff]
  %v30 = vld [vmem:[%s1 + $0xb8] sm:$0xff]
  %v31 = vld [vmem:[%s1 + $0xc0] sm:$0xff]
  %v32 = vld [vmem:[%s1 + $0xc8] sm:$0xff]
  %v33 = vld [vmem:[%s1 + $0xd0] sm:$0xff]
  %v34 = vld [vmem:[%s1 + $0xd8] sm:$0xff]
  %v35 = vld [vmem:[%s1 + $0xe0] sm:$0xff]
  %v36 = vld [vmem:[%s1 + $0xe8] sm:$0xff]
  %v37 = vld [vmem:[%s1 + $0xf0] sm:$0xff]
  %v38 = vld [vmem:[%s1 + $0xf8] sm:$0xff]
  %v39 = vld [vmem:[%s1 + $0x100] sm:$0xff]
  %v40 = vld [vmem:[%s1 + $0x108] sm:$0xff]
  %v41 = vld [vmem:[%s1 + $0x110] sm:$0xff]
  %v42 = vld [vmem:[%s1 + $0x118] sm:$0xff]
  %v43 = vld [vmem:[%s1 + $0x120] sm:$0xff]
  %v44 = vld [vmem:[%s1 + $0x128] sm:$0xff]
  %v45 = vld [vmem:[%s1 + $0x130] sm:$0xff]
  %v46 = vld [vmem:[%s1 + $0x138] sm:$0xff]
  %v47 = vld [vmem:[%s1 + $0x140] sm:$0xff]
  %v48 = vld [vmem:[%s1 + $0x148] sm:$0xff]
  %v49 = vld [vmem:[%s1 + $0x150] sm:$0xff]
  %v50 = vld [vmem:[%s1 + $0x158] sm:$0xff]
  %v51 = vld [vmem:[%s1 + $0x160] sm:$0xff]
  %v52 = vld [vmem:[%s1 + $0x168] sm:$0xff]
  %v53 = vld [vmem:[%s1 + $0x170] sm:$0xff]
  %v54 = vld [vmem:[%s1 + $0x178] sm:$0xff]
  %v55 = vld [vmem:[%s1 + $0x180] sm:$0xff]
  %v56 = vld [vmem:[%s1 + $0x188] sm:$0xff]
  %v57 = vld [vmem:[%s1 + $0x190] sm:$0xff]
  %v58 = vld [vmem:[%s1 + $0x198] sm:$0xff]
  %v59 = vld [vmem:[%s1 + $0x1a0] sm:$0xff]
  %v60 = vld [vmem:[%s1 + $0x1a8] sm:$0xff]
  %v61 = vld [vmem:[%s1 + $0x1b0] sm:$0xff]
  %v62 = vld [vmem:[%s1 + $0x1b8] sm:$0xff]
  %v63 = vld [vmem:[%s1 + $0x1c0] sm:$0xff]
  %v64 = vld [vmem:[%s1 + $0x1c8] sm:$0xff]
  %v65 = vld [vmem:[%s1 + $0x1d0] sm:$0xff]
  %v66 = vld [vmem:[%s1 + $0x1d8] sm:$0xff]
  %v67 = vld [vmem:[%s1 + $0x1e0] sm:$0xff]
  %v68 = vld [vmem:[%s1 + $0x1e8] sm:$0xff]
  %v69 = vld [vmem:[%s1 + $0x1f0] sm:$0xff]
  %v70 = vld [vmem:[%s1 + $0x1f8] sm:$0xff]
  %v71 = vld [vmem:[%s1 + $0x200] sm:$0xff]
  %v72 = vld [vmem:[%s1 + $0x208] sm:$0xff]
  %v73 = vld [vmem:[%s1 + $0x210] sm:$0xff]
  %v74 = vld [vmem:[%s1 + $0x218] sm:$0xff]
  %v75 = vld [vmem:[%s1 + $0x220] sm:$0xff]
  %v76 = vld [vmem:[%s1 + $0x228] sm:$0xff]
  %v77 = vld [vmem:[%s1 + $0x230] sm:$0xff]
  %v78 = vld [vmem:[%s1 + $0x238] sm:$0xff]
  %v79 = vld [vmem:[%s1 + $0x240] sm:$0xff]
  %v80 = vld [vmem:[%s1 + $0x248] sm:$0xff]
  %v81 = vld [vmem:[%s1 + $0x250] sm:$0xff]
  %v82 = vld [vmem:[%s1 + $0x258] sm:$0xff]
  %v83 = vld [vmem:[%s1 + $0x260] sm:$0xff]
  %v84 = vld [vmem:[%s1 + $0x268] sm:$0xff]
  %v85 = vld [vmem:[%s1 + $0x270] sm:$0xff]
  %v86 = vld [vmem:[%s1 + $0x278] sm:$0xff]
  %v87 = vld [vmem:[%s1 + $0x280] sm:$0xff]
  %v88 = vld [vmem:[%s1 + $0x288] sm:$0xff]
  %v89 = vld [vmem:[%s1 + $0x290] sm:$0xff]
  %v90 = vld [vmem:[%s1 + $0x298] sm:$0xff]
  %v91 = vld [vmem:[%s1 + $0x2a0] sm:$0xff]
  %v92 = vld [vmem:[%s1 + $0x2a8] sm:$0xff]
  %v93 = vld [vmem:[%s1 + $0x2b0] sm:$0xff]
  %v94 = vld [vmem:[%s1 + $0x2b8] sm:$0xff]
  %v95 = vld [vmem:[%s1 + $0x2c0] sm:$0xff]
  %v96 = vld [vmem:[%s1 + $0x2c8] sm:$0xff]
  %v97 = vld [vmem:[%s1 + $0x2d0] sm:$0xff]
  %v98 = vld [vmem:[%s1 + $0x2d8] sm:$0xff]
  %v99 = vld [vmem:[%s1 + $0x2e0] sm:$0xff]
  %v100 = vld [vmem:[%s1 + $0x2f0] sm:$0xff]
  %v101 = vld [vmem:[%s1 + $0x300] sm:$0xff]
  %v102 = vld [vmem:[%s1 + $0x310] sm:$0xff]
  %v103 = vld [vmem:[%s1 + $0x320] sm:$0xff]
  %v104 = vld [vmem:[%s1 + $0x330] sm:$0xff]
  %v105 = vld [vmem:[%s1 + $0x340] sm:$0xff]
  %v106 = vld [vmem:[%s1 + $0x350] sm:$0xff]
  %v107 = vld [vmem:[%s1 + $0x360] sm:$0xff]
  %v108 = vld [vmem:[%s1 + $0x370] sm:$0xff]
  %v109 = vld [vmem:[%s1 + $0x380] sm:$0xff]
  %v110 = vld [vmem:[%s1 + $0x390] sm:$0xff]
  %v111 = vld [vmem:[%s1 + $0x3a0] sm:$0xff]
  %v112 = vld [vmem:[%s1 + $0x3b0] sm:$0xff]
  %v113 = vld [vmem:[%s1 + $0x3c0] sm:$0xff]
  %v114 = vld [vmem:[%s1 + $0x3d0] sm:$0xff]
  %v115 = vld [vmem:[%s1 + $0x3e0] sm:$0xff]
  %v116 = vld [vmem:[%s1 + $0x3f0] sm:$0xff]
  %v117 = vld [vmem:[%s1 + $0x400] sm:$0xff]
  %v118 = vld [vmem:[%s1 + $0x410] sm:$0xff]
  %v119 = vld [vmem:[%s1 + $0x420] sm:$0xff]
  %v120 = vld [vmem:[%s1 + $0x428] sm:$0xff]
  %v121 = vld [vmem:[%s0] sm:$0xff]
  %v122 = vld [vmem:[%s0 + $0x8] sm:$0xff]
  %v123 = vld [vmem:[%s0 + $0x10] sm:$0xff]
  %v124 = vld [vmem:[%s0 + $0x18] sm:$0xff]
  %v125 = vld [vmem:[%s0 + $0x20] sm:$0xff]
  %v126 = vld [vmem:[%s0 + $0x28] sm:$0xff]
  %v127 = vld [vmem:[%s0 + $0x30] sm:$0xff]
  %v128 = vld [vmem:[%s0 + $0x38] sm:$0xff]
  %v129 = vlaneseq
  %v130 = vshrl.u32 %v129, 7
  %v131 = vsub.s32 0, %v130
  %v132 = vrot.slane %v119, %v131
  %v133 = vlaneseq
  %v134 = vshrl.u32 %v133, 7
  %v135 = vsub.s32 1, %v134
  %v136 = vrot.slane %v119, %v135
  %v137 = vlaneseq
  %v138 = vshrl.u32 %v137, 7
  %v139 = vsub.s32 1, %v138
  %v140 = vrot.slane %v120, %v139
  %141 = vxpose.xlu0.b32.start [1/16] %v121, 128
  %142 = vxpose.xlu0.b32.cont [2/16] %v122, 128
  %143 = vxpose.xlu0.b32.cont [3/16] %v123, 128
  %144 = vxpose.xlu0.b32.cont [4/16] %v124, 128
  %145 = vxpose.xlu0.b32.cont [5/16] 0.0, 128
  %146 = vxpose.xlu0.b32.cont [6/16] 0.0, 128
  %147 = vxpose.xlu0.b32.cont [7/16] 0.0, 128
  %148 = vxpose.xlu0.b32.cont [8/16] 0.0, 128
  %149 = vxpose.xlu0.b32.cont [9/16] 0.0, 128
  %150 = vxpose.xlu0.b32.cont [10/16] 0.0, 128
  %151 = vxpose.xlu0.b32.cont [11/16] 0.0, 128
  %152 = vxpose.xlu0.b32.cont [12/16] 0.0, 128
  %153 = vxpose.xlu0.b32.cont [13/16] 0.0, 128
  %154 = vxpose.xlu0.b32.cont [14/16] 0.0, 128
  %155 = vxpose.xlu0.b32.cont [15/16] 0.0, 128
  %156 = vxpose.xlu0.b32.end [16/16] 0.0, 128
  %v157 = vpop.trf.xlu0
  %v158 = vpop.trf.xlu0
  %v159 = vpop.trf.xlu0
  %v160 = vpop.trf.xlu0
  %v161 = vpop.trf.xlu0
  %v162 = vpop.trf.xlu0
  %v163 = vpop.trf.xlu0
  %v164 = vpop.trf.xlu0
  %v165 = vpop.trf.xlu0
  %v166 = vpop.trf.xlu0
  %v167 = vpop.trf.xlu0
  %v168 = vpop.trf.xlu0
  %v169 = vpop.trf.xlu0
  %v170 = vpop.trf.xlu0
  %v171 = vpop.trf.xlu0
  %v172 = vpop.trf.xlu0
  %vm173 = vcmask 261120
  %v175 = vsel %vm173, %v157, 0
  %v178 = vsel %vm173, %v158, 0
  %v181 = vsel %vm173, %v159, 0
  %v184 = vsel %vm173, %v160, 0
  %v187 = vsel %vm173, %v161, 0
  %v190 = vsel %vm173, %v162, 0
  %v193 = vsel %vm173, %v163, 0
  %v196 = vsel %vm173, %v164, 0
  %198 = vmatprep.subr.mxu0 0.0
  %199 = vmatpush1.msra.mxu0 %v11
  %200 = vmatprep.subr.mxu0 0.0
  %201 = vmatpush1.msra.mxu0 %v12
  %202 = vmatprep.subr.mxu0 0.0
  %203 = vmatpush1.msra.mxu0 %v13
  %204 = vmatprep.subr.mxu0 0.0
  %205 = vmatpush1.msra.mxu0 %v14
  %206 = vmatprep.subr.mxu0 0.0
  %207 = vmatpush1.msra.mxu0 0.0
  %208 = vmatprep.subr.mxu0 0.0
  %209 = vmatpush1.msra.mxu0 0.0
  %210 = vmatprep.subr.mxu0 0.0
  %211 = vmatpush1.msra.mxu0 0.0
  %212 = vmatprep.subr.mxu0 0.0
  %213 = vmatpush1.msra.mxu0 0.0
  %214 = vmatprep.subr.mxu0 0.0
  %215 = vmatpush1.msra.mxu0 0.0
  %216 = vmatprep.subr.mxu0 0.0
  %217 = vmatpush1.msra.mxu0 0.0
  %218 = vmatprep.subr.mxu0 0.0
  %219 = vmatpush1.msra.mxu0 0.0
  %220 = vmatprep.subr.mxu0 0.0
  %221 = vmatpush1.msra.mxu0 0.0
  %222 = vmatprep.subr.mxu0 0.0
  %223 = vmatpush1.msra.mxu0 0.0
  %224 = vmatprep.subr.mxu0 0.0
  %225 = vmatpush1.msra.mxu0 0.0
  %226 = vmatprep.subr.mxu0 0.0
  %227 = vmatpush1.msra.mxu0 0.0
  %228 = vmatprep.subr.mxu0 0.0
  %229 = vmatpush1.msra.mxu0 0.0
  %230 = vmatprep.subr.mxu0 0.0
  %231 = vmatpush1.msra.mxu0 0.0
  %232 = vmatprep.subr.mxu0 0.0
  %233 = vmatpush1.msra.mxu0 0.0
  %234 = vmatprep.subr.mxu0 0.0
  %235 = vmatpush1.msra.mxu0 0.0
  %236 = vmatprep.subr.mxu0 0.0
  %237 = vmatpush1.msra.mxu0 0.0
  %238 = vmatprep.subr.mxu0 0.0
  %239 = vmatpush1.msra.mxu0 0.0
  %240 = vmatprep.subr.mxu0 0.0
  %241 = vmatpush1.msra.mxu0 0.0
  %242 = vmatprep.subr.mxu0 0.0
  %243 = vmatpush1.msra.mxu0 0.0
  %244 = vmatprep.subr.mxu0 0.0
  %245 = vmatpush1.msra.mxu0 0.0
  %246 = vmatprep.subr.mxu0 0.0
  %247 = vmatpush1.msra.mxu0 0.0
  %248 = vmatprep.subr.mxu0 0.0
  %249 = vmatpush1.msra.mxu0 0.0
  %250 = vmatprep.subr.mxu0 0.0
  %251 = vmatpush1.msra.mxu0 0.0
  %252 = vmatprep.subr.mxu0 0.0
  %253 = vmatpush1.msra.mxu0 0.0
  %254 = vmatprep.subr.mxu0 0.0
  %255 = vmatpush1.msra.mxu0 0.0
  %256 = vmatprep.subr.mxu0 0.0
  %257 = vmatpush1.msra.mxu0 0.0
  %258 = vmatprep.subr.mxu0 0.0
  %259 = vmatpush1.msra.mxu0 0.0
  %260 = vmatprep.subr.mxu0 0.0
  %261 = vmatpush1.msra.mxu0 0.0
  %262 = vmatprep.mubr.f32.mxu0 0.0
  %263 = vmatmul.mubr.f32.gmra.mrb[0].mxu0 %v175
  %v264 = vpop.f32.mrb[0].mxu0
  %v265 = vadd.f32 %v132, %v264
  %v266 = vpop.f32.mrb[0].mxu0
  %267 = vmatprep.mubr.f32.mxu0 0.0
  %268 = vmatmul.mubr.f32.gmra.mrb[0].mxu0 %v178
  %v269 = vpop.f32.mrb[0].mxu0
  %v270 = vadd.f32 %v132, %v269
  %v271 = vpop.f32.mrb[0].mxu0
  %272 = vmatprep.mubr.f32.mxu0 0.0
  %273 = vmatmul.mubr.f32.gmra.mrb[0].mxu0 %v181
  %v274 = vpop.f32.mrb[0].mxu0
  %v275 = vadd.f32 %v132, %v274
  %v276 = vpop.f32.mrb[0].mxu0
  %277 = vmatprep.mubr.f32.mxu0 0.0
  %278 = vmatmul.mubr.f32.gmra.mrb[0].mxu0 %v184
  %v279 = vpop.f32.mrb[0].mxu0
  %v280 = vadd.f32 %v132, %v279
  %v281 = vpop.f32.mrb[0].mxu0
  %282 = vmatprep.mubr.f32.mxu0 0.0
  %283 = vmatmul.mubr.f32.gmra.mrb[0].mxu0 %v187
  %v284 = vpop.f32.mrb[0].mxu0
  %v285 = vadd.f32 %v132, %v284
  %v286 = vpop.f32.mrb[0].mxu0
  %287 = vmatprep.mubr.f32.mxu0 0.0
  %288 = vmatmul.mubr.f32.gmra.mrb[0].mxu0 %v190
  %v289 = vpop.f32.mrb[0].mxu0
  %v290 = vadd.f32 %v132, %v289
  %v291 = vpop.f32.mrb[0].mxu0
  %292 = vmatprep.mubr.f32.mxu0 0.0
  %293 = vmatmul.mubr.f32.gmra.mrb[0].mxu0 %v193
  %v294 = vpop.f32.mrb[0].mxu0
  %v295 = vadd.f32 %v132, %v294
  %v296 = vpop.f32.mrb[0].mxu0
  %297 = vmatprep.mubr.f32.mxu0 0.0
  %298 = vmatmul.mubr.f32.gmra.mrb[0].mxu0 %v196
  %v299 = vpop.f32.mrb[0].mxu0
  %v300 = vadd.f32 %v132, %v299
  %v301 = vpop.f32.mrb[0].mxu0
  %302 = vdwg.mxu0
  %v303 = vmax.f32 %v265, 0.0
  %v304 = vmax.f32 %v270, 0.0
  %v305 = vmax.f32 %v275, 0.0
  %v306 = vmax.f32 %v280, 0.0
  %v307 = vmax.f32 %v285, 0.0
  %v308 = vmax.f32 %v290, 0.0
  %v309 = vmax.f32 %v295, 0.0
  %v310 = vmax.f32 %v300, 0.0
  %vm311 = vcmask 130048
  %v313 = vsel %vm311, %v303, 0
  %v316 = vsel %vm311, %v304, 0
  %v319 = vsel %vm311, %v305, 0
  %v322 = vsel %vm311, %v306, 0
  %v325 = vsel %vm311, %v307, 0
  %v328 = vsel %vm311, %v308, 0
  %v331 = vsel %vm311, %v309, 0
  %v334 = vsel %vm311, %v310, 0
  %336 = vmatprep.subr.mxu0 %v16
  %337 = vmatpush1.msra.mxu0 %v15
  %338 = vmatprep.subr.mxu0 %v18
  %339 = vmatpush1.msra.mxu0 %v17
  %340 = vmatprep.subr.mxu0 0.0
  %341 = vmatpush1.msra.mxu0 0.0
  %342 = vmatprep.subr.mxu0 0.0
  %343 = vmatpush1.msra.mxu0 0.0
  %344 = vmatprep.subr.mxu0 0.0
  %345 = vmatpush1.msra.mxu0 0.0
  %346 = vmatprep.subr.mxu0 0.0
  %347 = vmatpush1.msra.mxu0 0.0
  %348 = vmatprep.subr.mxu0 0.0
  %349 = vmatpush1.msra.mxu0 0.0
  %350 = vmatprep.subr.mxu0 0.0
  %351 = vmatpush1.msra.mxu0 0.0
  %352 = vmatprep.subr.mxu0 0.0
  %353 = vmatpush1.msra.mxu0 0.0
  %354 = vmatprep.subr.mxu0 0.0
  %355 = vmatpush1.msra.mxu0 0.0
  %356 = vmatprep.subr.mxu0 0.0
  %357 = vmatpush1.msra.mxu0 0.0
  %358 = vmatprep.subr.mxu0 0.0
  %359 = vmatpush1.msra.mxu0 0.0
  %360 = vmatprep.subr.mxu0 0.0
  %361 = vmatpush1.msra.mxu0 0.0
  %362 = vmatprep.subr.mxu0 0.0
  %363 = vmatpush1.msra.mxu0 0.0
  %364 = vmatprep.subr.mxu0 0.0
  %365 = vmatpush1.msra.mxu0 0.0
  %366 = vmatprep.subr.mxu0 0.0
  %367 = vmatpush1.msra.mxu0 0.0
  %368 = vmatprep.subr.mxu0 0.0
  %369 = vmatpush1.msra.mxu0 0.0
  %370 = vmatprep.subr.mxu0 0.0
  %371 = vmatpush1.msra.mxu0 0.0
  %372 = vmatprep.subr.mxu0 0.0
  %373 = vmatpush1.msra.mxu0 0.0
  %374 = vmatprep.subr.mxu0 0.0
  %375 = vmatpush1.msra.mxu0 0.0
  %376 = vmatprep.subr.mxu0 0.0
  %377 = vmatpush1.msra.mxu0 0.0
  %378 = vmatprep.subr.mxu0 0.0
  %379 = vmatpush1.msra.mxu0 0.0
  %380 = vmatprep.subr.mxu0 0.0
  %381 = vmatpush1.msra.mxu0 0.0
  %382 = vmatprep.subr.mxu0 0.0
  %383 = vmatpush1.msra.mxu0 0.0
  %384 = vmatprep.subr.mxu0 0.0
  %385 = vmatpush1.msra.mxu0 0.0
  %386 = vmatprep.subr.mxu0 0.0
  %387 = vmatpush1.msra.mxu0 0.0
  %388 = vmatprep.subr.mxu0 0.0
  %389 = vmatpush1.msra.mxu0 0.0
  %390 = vmatprep.subr.mxu0 0.0
  %391 = vmatpush1.msra.mxu0 0.0
  %392 = vmatprep.subr.mxu0 0.0
  %393 = vmatpush1.msra.mxu0 0.0
  %394 = vmatprep.subr.mxu0 0.0
  %395 = vmatpush1.msra.mxu0 0.0
  %396 = vmatprep.subr.mxu0 0.0
  %397 = vmatpush1.msra.mxu0 0.0
  %398 = vmatprep.subr.mxu0 0.0
  %399 = vmatpush1.msra.mxu0 0.0
  %400 = vmatprep.mubr.f32.mxu0 0.0
  %401 = vmatmul.mubr.f32.gmra.mrb[0].mxu0 %v313
  %v402 = vpop.f32.mrb[0].mxu0
  %v403 = vadd.f32 %v136, %v402
  %v404 = vpop.f32.mrb[0].mxu0
  %v405 = vadd.f32 %v140, %v404
  %406 = vmatprep.mubr.f32.mxu0 0.0
  %407 = vmatmul.mubr.f32.gmra.mrb[0].mxu0 %v316
  %v408 = vpop.f32.mrb[0].mxu0
  %v409 = vadd.f32 %v136, %v408
  %v410 = vpop.f32.mrb[0].mxu0
  %v411 = vadd.f32 %v140, %v410
  %412 = vmatprep.mubr.f32.mxu0 0.0
  %413 = vmatmul.mubr.f32.gmra.mrb[0].mxu0 %v319
  %v414 = vpop.f32.mrb[0].mxu0
  %v415 = vadd.f32 %v136, %v414
  %v416 = vpop.f32.mrb[0].mxu0
  %v417 = vadd.f32 %v140, %v416
  %418 = vmatprep.mubr.f32.mxu0 0.0
  %419 = vmatmul.mubr.f32.gmra.mrb[0].mxu0 %v322
  %v420 = vpop.f32.mrb[0].mxu0
  %v421 = vadd.f32 %v136, %v420
  %v422 = vpop.f32.mrb[0].mxu0
  %v423 = vadd.f32 %v140, %v422
  %424 = vmatprep.mubr.f32.mxu0 0.0
  %425 = vmatmul.mubr.f32.gmra.mrb[0].mxu0 %v325
  %v426 = vpop.f32.mrb[0].mxu0
  %v427 = vadd.f32 %v136, %v426
  %v428 = vpop.f32.mrb[0].mxu0
  %v429 = vadd.f32 %v140, %v428
  %430 = vmatprep.mubr.f32.mxu0 0.0
  %431 = vmatmul.mubr.f32.gmra.mrb[0].mxu0 %v328
  %v432 = vpop.f32.mrb[0].mxu0
  %v433 = vadd.f32 %v136, %v432
  %v434 = vpop.f32.mrb[0].mxu0
  %v435 = vadd.f32 %v140, %v434
  %436 = vmatprep.mubr.f32.mxu0 0.0
  %437 = vmatmul.mubr.f32.gmra.mrb[0].mxu0 %v331
  %v438 = vpop.f32.mrb[0].mxu0
  %v439 = vadd.f32 %v136, %v438
  %v440 = vpop.f32.mrb[0].mxu0
  %v441 = vadd.f32 %v140, %v440
  %442 = vmatprep.mubr.f32.mxu0 0.0
  %443 = vmatmul.mubr.f32.gmra.mrb[0].mxu0 %v334
  %v444 = vpop.f32.mrb[0].mxu0
  %v445 = vadd.f32 %v136, %v444
  %v446 = vpop.f32.mrb[0].mxu0
  %v447 = vadd.f32 %v140, %v446
  %448 = vdwg.mxu0
  %449 = vxpose.xlu0.b32.start [1/16] %v125, 128
  %450 = vxpose.xlu0.b32.cont [2/16] %v126, 128
  %451 = vxpose.xlu0.b32.cont [3/16] %v127, 128
  %452 = vxpose.xlu0.b32.cont [4/16] %v128, 128
  %453 = vxpose.xlu0.b32.cont [5/16] 0.0, 128
  %454 = vxpose.xlu0.b32.cont [6/16] 0.0, 128
  %455 = vxpose.xlu0.b32.cont [7/16] 0.0, 128
  %456 = vxpose.xlu0.b32.cont [8/16] 0.0, 128
  %457 = vxpose.xlu0.b32.cont [9/16] 0.0, 128
  %458 = vxpose.xlu0.b32.cont [10/16] 0.0, 128
  %459 = vxpose.xlu0.b32.cont [11/16] 0.0, 128
  %460 = vxpose.xlu0.b32.cont [12/16] 0.0, 128
  %461 = vxpose.xlu0.b32.cont [13/16] 0.0, 128
  %462 = vxpose.xlu0.b32.cont [14/16] 0.0, 128
  %463 = vxpose.xlu0.b32.cont [15/16] 0.0, 128
  %464 = vxpose.xlu0.b32.end [16/16] 0.0, 128
  %v465 = vpop.trf.xlu0
  %v466 = vpop.trf.xlu0
  %v467 = vpop.trf.xlu0
  %v468 = vpop.trf.xlu0
  %v469 = vpop.trf.xlu0
  %v470 = vpop.trf.xlu0
  %v471 = vpop.trf.xlu0
  %v472 = vpop.trf.xlu0
  %v473 = vpop.trf.xlu0
  %v474 = vpop.trf.xlu0
  %v475 = vpop.trf.xlu0
  %v476 = vpop.trf.xlu0
  %v477 = vpop.trf.xlu0
  %v478 = vpop.trf.xlu0
  %v479 = vpop.trf.xlu0
  %v480 = vpop.trf.xlu0
  %v482 = vsel %vm173, %v465, 0
  %v485 = vsel %vm173, %v466, 0
  %v488 = vsel %vm173, %v467, 0
  %v491 = vsel %vm173, %v468, 0
  %v494 = vsel %vm173, %v469, 0
  %v497 = vsel %vm173, %v470, 0
  %v500 = vsel %vm173, %v471, 0
  %v503 = vsel %vm173, %v472, 0
  %505 = vmatprep.subr.mxu0 0.0
  %506 = vmatpush1.msra.mxu0 %v11
  %507 = vmatprep.subr.mxu0 0.0
  %508 = vmatpush1.msra.mxu0 %v12
  %509 = vmatprep.subr.mxu0 0.0
  %510 = vmatpush1.msra.mxu0 %v13
  %511 = vmatprep.subr.mxu0 0.0
  %512 = vmatpush1.msra.mxu0 %v14
  %513 = vmatprep.subr.mxu0 0.0
  %514 = vmatpush1.msra.mxu0 0.0
  %515 = vmatprep.subr.mxu0 0.0
  %516 = vmatpush1.msra.mxu0 0.0
  %517 = vmatprep.subr.mxu0 0.0
  %518 = vmatpush1.msra.mxu0 0.0
  %519 = vmatprep.subr.mxu0 0.0
  %520 = vmatpush1.msra.mxu0 0.0
  %521 = vmatprep.subr.mxu0 0.0
  %522 = vmatpush1.msra.mxu0 0.0
  %523 = vmatprep.subr.mxu0 0.0
  %524 = vmatpush1.msra.mxu0 0.0
  %525 = vmatprep.subr.mxu0 0.0
  %526 = vmatpush1.msra.mxu0 0.0
  %527 = vmatprep.subr.mxu0 0.0
  %528 = vmatpush1.msra.mxu0 0.0
  %529 = vmatprep.subr.mxu0 0.0
  %530 = vmatpush1.msra.mxu0 0.0
  %531 = vmatprep.subr.mxu0 0.0
  %532 = vmatpush1.msra.mxu0 0.0
  %533 = vmatprep.subr.mxu0 0.0
  %534 = vmatpush1.msra.mxu0 0.0
  %535 = vmatprep.subr.mxu0 0.0
  %536 = vmatpush1.msra.mxu0 0.0
  %537 = vmatprep.subr.mxu0 0.0
  %538 = vmatpush1.msra.mxu0 0.0
  %539 = vmatprep.subr.mxu0 0.0
  %540 = vmatpush1.msra.mxu0 0.0
  %541 = vmatprep.subr.mxu0 0.0
  %542 = vmatpush1.msra.mxu0 0.0
  %543 = vmatprep.subr.mxu0 0.0
  %544 = vmatpush1.msra.mxu0 0.0
  %545 = vmatprep.subr.mxu0 0.0
  %546 = vmatpush1.msra.mxu0 0.0
  %547 = vmatprep.subr.mxu0 0.0
  %548 = vmatpush1.msra.mxu0 0.0
  %549 = vmatprep.subr.mxu0 0.0
  %550 = vmatpush1.msra.mxu0 0.0
  %551 = vmatprep.subr.mxu0 0.0
  %552 = vmatpush1.msra.mxu0 0.0
  %553 = vmatprep.subr.mxu0 0.0
  %554 = vmatpush1.msra.mxu0 0.0
  %555 = vmatprep.subr.mxu0 0.0
  %556 = vmatpush1.msra.mxu0 0.0
  %557 = vmatprep.subr.mxu0 0.0
  %558 = vmatpush1.msra.mxu0 0.0
  %559 = vmatprep.subr.mxu0 0.0
  %560 = vmatpush1.msra.mxu0 0.0
  %561 = vmatprep.subr.mxu0 0.0
  %562 = vmatpush1.msra.mxu0 0.0
  %563 = vmatprep.subr.mxu0 0.0
  %564 = vmatpush1.msra.mxu0 0.0
  %565 = vmatprep.subr.mxu0 0.0
  %566 = vmatpush1.msra.mxu0 0.0
  %567 = vmatprep.subr.mxu0 0.0
  %568 = vmatpush1.msra.mxu0 0.0
  %569 = vmatprep.mubr.f32.mxu0 0.0
  %570 = vmatmul.mubr.f32.gmra.mrb[0].mxu0 %v482
  %v571 = vpop.f32.mrb[0].mxu0
  %v572 = vadd.f32 %v132, %v571
  %v573 = vpop.f32.mrb[0].mxu0
  %574 = vmatprep.mubr.f32.mxu0 0.0
  %575 = vmatmul.mubr.f32.gmra.mrb[0].mxu0 %v485
  %v576 = vpop.f32.mrb[0].mxu0
  %v577 = vadd.f32 %v132, %v576
  %v578 = vpop.f32.mrb[0].mxu0
  %579 = vmatprep.mubr.f32.mxu0 0.0
  %580 = vmatmul.mubr.f32.gmra.mrb[0].mxu0 %v488
  %v581 = vpop.f32.mrb[0].mxu0
  %v582 = vadd.f32 %v132, %v581
  %v583 = vpop.f32.mrb[0].mxu0
  %584 = vmatprep.mubr.f32.mxu0 0.0
  %585 = vmatmul.mubr.f32.gmra.mrb[0].mxu0 %v491
  %v586 = vpop.f32.mrb[0].mxu0
  %v587 = vadd.f32 %v132, %v586
  %v588 = vpop.f32.mrb[0].mxu0
  %589 = vmatprep.mubr.f32.mxu0 0.0
  %590 = vmatmul.mubr.f32.gmra.mrb[0].mxu0 %v494
  %v591 = vpop.f32.mrb[0].mxu0
  %v592 = vadd.f32 %v132, %v591
  %v593 = vpop.f32.mrb[0].mxu0
  %594 = vmatprep.mubr.f32.mxu0 0.0
  %595 = vmatmul.mubr.f32.gmra.mrb[0].mxu0 %v497
  %v596 = vpop.f32.mrb[0].mxu0
  %v597 = vadd.f32 %v132, %v596
  %v598 = vpop.f32.mrb[0].mxu0
  %599 = vmatprep.mubr.f32.mxu0 0.0
  %600 = vmatmul.mubr.f32.gmra.mrb[0].mxu0 %v500
  %v601 = vpop.f32.mrb[0].mxu0
  %v602 = vadd.f32 %v132, %v601
  %v603 = vpop.f32.mrb[0].mxu0
  %604 = vmatprep.mubr.f32.mxu0 0.0
  %605 = vmatmul.mubr.f32.gmra.mrb[0].mxu0 %v503
  %v606 = vpop.f32.mrb[0].mxu0
  %v607 = vadd.f32 %v132, %v606
  %v608 = vpop.f32.mrb[0].mxu0
  %609 = vdwg.mxu0
  %v610 = vmax.f32 %v572, 0.0
  %v611 = vmax.f32 %v577, 0.0
  %v612 = vmax.f32 %v582, 0.0
  %v613 = vmax.f32 %v587, 0.0
  %v614 = vmax.f32 %v592, 0.0
  %v615 = vmax.f32 %v597, 0.0
  %v616 = vmax.f32 %v602, 0.0
  %v617 = vmax.f32 %v607, 0.0
  %v619 = vsel %vm311, %v610, 0
  %v622 = vsel %vm311, %v611, 0
  %v625 = vsel %vm311, %v612, 0
  %v628 = vsel %vm311, %v613, 0
  %v631 = vsel %vm311, %v614, 0
  %v634 = vsel %vm311, %v615, 0
  %v637 = vsel %vm311, %v616, 0
  %v640 = vsel %vm311, %v617, 0
  %642 = vmatprep.subr.mxu0 %v16
  %643 = vmatpush1.msra.mxu0 %v15
  %644 = vmatprep.subr.mxu0 %v18
  %645 = vmatpush1.msra.mxu0 %v17
  %646 = vmatprep.subr.mxu0 0.0
  %647 = vmatpush1.msra.mxu0 0.0
  %648 = vmatprep.subr.mxu0 0.0
  %649 = vmatpush1.msra.mxu0 0.0
  %650 = vmatprep.subr.mxu0 0.0
  %651 = vmatpush1.msra.mxu0 0.0
  %652 = vmatprep.subr.mxu0 0.0
  %653 = vmatpush1.msra.mxu0 0.0
  %654 = vmatprep.subr.mxu0 0.0
  %655 = vmatpush1.msra.mxu0 0.0
  %656 = vmatprep.subr.mxu0 0.0
  %657 = vmatpush1.msra.mxu0 0.0
  %658 = vmatprep.subr.mxu0 0.0
  %659 = vmatpush1.msra.mxu0 0.0
  %660 = vmatprep.subr.mxu0 0.0
  %661 = vmatpush1.msra.mxu0 0.0
  %662 = vmatprep.subr.mxu0 0.0
  %663 = vmatpush1.msra.mxu0 0.0
  %664 = vmatprep.subr.mxu0 0.0
  %665 = vmatpush1.msra.mxu0 0.0
  %666 = vmatprep.subr.mxu0 0.0
  %667 = vmatpush1.msra.mxu0 0.0
  %668 = vmatprep.subr.mxu0 0.0
  %669 = vmatpush1.msra.mxu0 0.0
  %670 = vmatprep.subr.mxu0 0.0
  %671 = vmatpush1.msra.mxu0 0.0
  %672 = vmatprep.subr.mxu0 0.0
  %673 = vmatpush1.msra.mxu0 0.0
  %674 = vmatprep.subr.mxu0 0.0
  %675 = vmatpush1.msra.mxu0 0.0
  %676 = vmatprep.subr.mxu0 0.0
  %677 = vmatpush1.msra.mxu0 0.0
  %678 = vmatprep.subr.mxu0 0.0
  %679 = vmatpush1.msra.mxu0 0.0
  %680 = vmatprep.subr.mxu0 0.0
  %681 = vmatpush1.msra.mxu0 0.0
  %682 = vmatprep.subr.mxu0 0.0
  %683 = vmatpush1.msra.mxu0 0.0
  %684 = vmatprep.subr.mxu0 0.0
  %685 = vmatpush1.msra.mxu0 0.0
  %686 = vmatprep.subr.mxu0 0.0
  %687 = vmatpush1.msra.mxu0 0.0
  %688 = vmatprep.subr.mxu0 0.0
  %689 = vmatpush1.msra.mxu0 0.0
  %690 = vmatprep.subr.mxu0 0.0
  %691 = vmatpush1.msra.mxu0 0.0
  %692 = vmatprep.subr.mxu0 0.0
  %693 = vmatpush1.msra.mxu0 0.0
  %694 = vmatprep.subr.mxu0 0.0
  %695 = vmatpush1.msra.mxu0 0.0
  %696 = vmatprep.subr.mxu0 0.0
  %697 = vmatpush1.msra.mxu0 0.0
  %698 = vmatprep.subr.mxu0 0.0
  %699 = vmatpush1.msra.mxu0 0.0
  %700 = vmatprep.subr.mxu0 0.0
  %701 = vmatpush1.msra.mxu0 0.0
  %702 = vmatprep.subr.mxu0 0.0
  %703 = vmatpush1.msra.mxu0 0.0
  %704 = vmatprep.subr.mxu0 0.0
  %705 = vmatpush1.msra.mxu0 0.0
  %706 = vmatprep.mubr.f32.mxu0 0.0
  %707 = vmatmul.mubr.f32.gmra.mrb[0].mxu0 %v619
  %v708 = vpop.f32.mrb[0].mxu0
  %v709 = vadd.f32 %v136, %v708
  %v710 = vpop.f32.mrb[0].mxu0
  %v711 = vadd.f32 %v140, %v710
  %712 = vmatprep.mubr.f32.mxu0 0.0
  %713 = vmatmul.mubr.f32.gmra.mrb[0].mxu0 %v622
  %v714 = vpop.f32.mrb[0].mxu0
  %v715 = vadd.f32 %v136, %v714
  %v716 = vpop.f32.mrb[0].mxu0
  %v717 = vadd.f32 %v140, %v716
  %718 = vmatprep.mubr.f32.mxu0 0.0
  %719 = vmatmul.mubr.f32.gmra.mrb[0].mxu0 %v625
  %v720 = vpop.f32.mrb[0].mxu0
  %v721 = vadd.f32 %v136, %v720
  %v722 = vpop.f32.mrb[0].mxu0
  %v723 = vadd.f32 %v140, %v722
  %724 = vmatprep.mubr.f32.mxu0 0.0
  %725 = vmatmul.mubr.f32.gmra.mrb[0].mxu0 %v628
  %v726 = vpop.f32.mrb[0].mxu0
  %v727 = vadd.f32 %v136, %v726
  %v728 = vpop.f32.mrb[0].mxu0
  %v729 = vadd.f32 %v140, %v728
  %730 = vmatprep.mubr.f32.mxu0 0.0
  %731 = vmatmul.mubr.f32.gmra.mrb[0].mxu0 %v631
  %v732 = vpop.f32.mrb[0].mxu0
  %v733 = vadd.f32 %v136, %v732
  %v734 = vpop.f32.mrb[0].mxu0
  %v735 = vadd.f32 %v140, %v734
  %736 = vmatprep.mubr.f32.mxu0 0.0
  %737 = vmatmul.mubr.f32.gmra.mrb[0].mxu0 %v634
  %v738 = vpop.f32.mrb[0].mxu0
  %v739 = vadd.f32 %v136, %v738
  %v740 = vpop.f32.mrb[0].mxu0
  %v741 = vadd.f32 %v140, %v740
  %742 = vmatprep.mubr.f32.mxu0 0.0
  %743 = vmatmul.mubr.f32.gmra.mrb[0].mxu0 %v637
  %v744 = vpop.f32.mrb[0].mxu0
  %v745 = vadd.f32 %v136, %v744
  %v746 = vpop.f32.mrb[0].mxu0
  %v747 = vadd.f32 %v140, %v746
  %748 = vmatprep.mubr.f32.mxu0 0.0
  %749 = vmatmul.mubr.f32.gmra.mrb[0].mxu0 %v640
  %v750 = vpop.f32.mrb[0].mxu0
  %v751 = vadd.f32 %v136, %v750
  %v752 = vpop.f32.mrb[0].mxu0
  %v753 = vadd.f32 %v140, %v752
  %754 = vdwg.mxu0
  %v755 = vadd.f32 %v403, %v409
  %v756 = vadd.f32 %v755, %v415
  %v757 = vadd.f32 %v756, %v421
  %v758 = vadd.f32 %v757, %v427
  %v759 = vadd.f32 %v758, %v433
  %v760 = vadd.f32 %v759, %v439
  %v761 = vadd.f32 %v760, %v445
  %v762 = vrot.slane %v761, 4
  %v763 = vadd.f32 %v761, %v762
  %v764 = vrot.slane %v763, 2
  %v765 = vadd.f32 %v763, %v764
  %v766 = vrot.slane %v765, 1
  %v767 = vadd.f32 %v765, %v766
  %v768 = vsel %vm173, %v405, 0.0
  %v769 = vsel %vm173, %v411, 0.0
  %v770 = vadd.f32 %v768, %v769
  %v771 = vsel %vm173, %v417, 0.0
  %v772 = vadd.f32 %v770, %v771
  %v773 = vsel %vm173, %v423, 0.0
  %v774 = vadd.f32 %v772, %v773
  %v775 = vsel %vm173, %v429, 0.0
  %v776 = vadd.f32 %v774, %v775
  %v777 = vsel %vm173, %v435, 0.0
  %v778 = vadd.f32 %v776, %v777
  %v779 = vsel %vm173, %v441, 0.0
  %v780 = vadd.f32 %v778, %v779
  %v781 = vsel %vm173, %v447, 0.0
  %v782 = vadd.f32 %v780, %v781
  %v783 = vrot.slane %v782, 4
  %v784 = vadd.f32 %v782, %v783
  %v785 = vrot.slane %v784, 2
  %v786 = vadd.f32 %v784, %v785
  %v787 = vrot.slane %v786, 1
  %v788 = vadd.f32 %v786, %v787
  %v789 = vrcp.pop 64.0
  %v790 = vmul.f32 %v767, %v789
  %v791 = vmul.f32 %v788, %v789
  %v792 = vadd.f32 %v709, %v715
  %v793 = vadd.f32 %v792, %v721
  %v794 = vadd.f32 %v793, %v727
  %v795 = vadd.f32 %v794, %v733
  %v796 = vadd.f32 %v795, %v739
  %v797 = vadd.f32 %v796, %v745
  %v798 = vadd.f32 %v797, %v751
  %v799 = vrot.slane %v798, 4
  %v800 = vadd.f32 %v798, %v799
  %v801 = vrot.slane %v800, 2
  %v802 = vadd.f32 %v800, %v801
  %v803 = vrot.slane %v802, 1
  %v804 = vadd.f32 %v802, %v803
  %v805 = vsel %vm173, %v711, 0.0
  %v806 = vsel %vm173, %v717, 0.0
  %v807 = vadd.f32 %v805, %v806
  %v808 = vsel %vm173, %v723, 0.0
  %v809 = vadd.f32 %v807, %v808
  %v810 = vsel %vm173, %v729, 0.0
  %v811 = vadd.f32 %v809, %v810
  %v812 = vsel %vm173, %v735, 0.0
  %v813 = vadd.f32 %v811, %v812
  %v814 = vsel %vm173, %v741, 0.0
  %v815 = vadd.f32 %v813, %v814
  %v816 = vsel %vm173, %v747, 0.0
  %v817 = vadd.f32 %v815, %v816
  %v818 = vsel %vm173, %v753, 0.0
  %v819 = vadd.f32 %v817, %v818
  %v820 = vrot.slane %v819, 4
  %v821 = vadd.f32 %v819, %v820
  %v822 = vrot.slane %v821, 2
  %v823 = vadd.f32 %v821, %v822
  %v824 = vrot.slane %v823, 1
  %v825 = vadd.f32 %v823, %v824
  %v826 = vmul.f32 %v804, %v789
  %v827 = vmul.f32 %v825, %v789
  %vm828 = vcmask 1040384
  %v829 = vsel %vm828, %v790, %v826
  %v830 = vsel %vm828, %v791, %v827
  %v831 = vmax.f32 %v403, %v415
  %v832 = vmax.f32 %v409, %v421
  %v833 = vmax.f32 %v831, %v427
  %v834 = vmax.f32 %v832, %v433
  %v835 = vmax.f32 %v833, %v439
  %v836 = vmax.f32 %v834, %v445
  %v837 = vmax.f32 %v835, %v836
  %v838 = vrot.slane %v837, 4
  %v839 = vmax.f32 %v837, %v838
  %v840 = vrot.slane %v839, 2
  %v841 = vmax.f32 %v839, %v840
  %v842 = vrot.slane %v841, 1
  %v843 = vmax.f32 %v841, %v842
  %v844 = vsel %vm173, %v405, -inf
  %v845 = vsel %vm173, %v411, -inf
  %v846 = vsel %vm173, %v417, -inf
  %v847 = vmax.f32 %v844, %v846
  %v848 = vsel %vm173, %v423, -inf
  %v849 = vmax.f32 %v845, %v848
  %v850 = vsel %vm173, %v429, -inf
  %v851 = vmax.f32 %v847, %v850
  %v852 = vsel %vm173, %v435, -inf
  %v853 = vmax.f32 %v849, %v852
  %v854 = vsel %vm173, %v441, -inf
  %v855 = vmax.f32 %v851, %v854
  %v856 = vsel %vm173, %v447, -inf
  %v857 = vmax.f32 %v853, %v856
  %v858 = vmax.f32 %v855, %v857
  %v859 = vrot.slane %v858, 4
  %v860 = vmax.f32 %v858, %v859
  %v861 = vrot.slane %v860, 2
  %v862 = vmax.f32 %v860, %v861
  %v863 = vrot.slane %v862, 1
  %v864 = vmax.f32 %v862, %v863
  %v865 = vmax.f32 %v709, %v721
  %v866 = vmax.f32 %v715, %v727
  %v867 = vmax.f32 %v865, %v733
  %v868 = vmax.f32 %v866, %v739
  %v869 = vmax.f32 %v867, %v745
  %v870 = vmax.f32 %v868, %v751
  %v871 = vmax.f32 %v869, %v870
  %v872 = vrot.slane %v871, 4
  %v873 = vmax.f32 %v871, %v872
  %v874 = vrot.slane %v873, 2
  %v875 = vmax.f32 %v873, %v874
  %v876 = vrot.slane %v875, 1
  %v877 = vmax.f32 %v875, %v876
  %v878 = vsel %vm173, %v711, -inf
  %v879 = vsel %vm173, %v717, -inf
  %v880 = vsel %vm173, %v723, -inf
  %v881 = vmax.f32 %v878, %v880
  %v882 = vsel %vm173, %v729, -inf
  %v883 = vmax.f32 %v879, %v882
  %v884 = vsel %vm173, %v735, -inf
  %v885 = vmax.f32 %v881, %v884
  %v886 = vsel %vm173, %v741, -inf
  %v887 = vmax.f32 %v883, %v886
  %v888 = vsel %vm173, %v747, -inf
  %v889 = vmax.f32 %v885, %v888
  %v890 = vsel %vm173, %v753, -inf
  %v891 = vmax.f32 %v887, %v890
  %v892 = vmax.f32 %v889, %v891
  %v893 = vrot.slane %v892, 4
  %v894 = vmax.f32 %v892, %v893
  %v895 = vrot.slane %v894, 2
  %v896 = vmax.f32 %v894, %v895
  %v897 = vrot.slane %v896, 1
  %v898 = vmax.f32 %v896, %v897
  %v899 = vsel %vm828, %v843, %v877
  %v900 = vsel %vm828, %v864, %v898
  %v902 = vsel %vm173, %v900, 0
  %904 = vmatprep.subr.mxu0 %v60
  %905 = vmatpush1.msra.mxu0 %v59
  %906 = vmatprep.subr.mxu0 %v62
  %907 = vmatpush1.msra.mxu0 %v61
  %908 = vmatprep.subr.mxu0 %v64
  %909 = vmatpush1.msra.mxu0 %v63
  %910 = vmatprep.subr.mxu0 %v66
  %911 = vmatpush1.msra.mxu0 %v65
  %912 = vmatprep.subr.mxu0 %v68
  %913 = vmatpush1.msra.mxu0 %v67
  %914 = vmatprep.subr.mxu0 %v70
  %915 = vmatpush1.msra.mxu0 %v69
  %916 = vmatprep.subr.mxu0 %v72
  %917 = vmatpush1.msra.mxu0 %v71
  %918 = vmatprep.subr.mxu0 %v74
  %919 = vmatpush1.msra.mxu0 %v73
  %920 = vmatprep.subr.mxu0 %v76
  %921 = vmatpush1.msra.mxu0 %v75
  %922 = vmatprep.subr.mxu0 %v78
  %923 = vmatpush1.msra.mxu0 %v77
  %924 = vmatprep.subr.mxu0 %v80
  %925 = vmatpush1.msra.mxu0 %v79
  %926 = vmatprep.subr.mxu0 %v82
  %927 = vmatpush1.msra.mxu0 %v81
  %928 = vmatprep.subr.mxu0 %v84
  %929 = vmatpush1.msra.mxu0 %v83
  %930 = vmatprep.subr.mxu0 %v86
  %931 = vmatpush1.msra.mxu0 %v85
  %932 = vmatprep.subr.mxu0 %v88
  %933 = vmatpush1.msra.mxu0 %v87
  %934 = vmatprep.subr.mxu0 %v90
  %935 = vmatpush1.msra.mxu0 %v89
  %936 = vmatprep.subr.mxu0 %v92
  %937 = vmatpush1.msra.mxu0 %v91
  %938 = vmatprep.subr.mxu0 %v94
  %939 = vmatpush1.msra.mxu0 %v93
  %940 = vmatprep.subr.mxu0 %v96
  %941 = vmatpush1.msra.mxu0 %v95
  %942 = vmatprep.subr.mxu0 %v98
  %943 = vmatpush1.msra.mxu0 %v97
  %944 = vmatprep.subr.mxu0 0.0
  %945 = vmatpush1.msra.mxu0 0.0
  %946 = vmatprep.subr.mxu0 0.0
  %947 = vmatpush1.msra.mxu0 0.0
  %948 = vmatprep.subr.mxu0 0.0
  %949 = vmatpush1.msra.mxu0 0.0
  %950 = vmatprep.subr.mxu0 0.0
  %951 = vmatpush1.msra.mxu0 0.0
  %952 = vmatprep.subr.mxu0 0.0
  %953 = vmatpush1.msra.mxu0 0.0
  %954 = vmatprep.subr.mxu0 0.0
  %955 = vmatpush1.msra.mxu0 0.0
  %956 = vmatprep.subr.mxu0 0.0
  %957 = vmatpush1.msra.mxu0 0.0
  %958 = vmatprep.subr.mxu0 0.0
  %959 = vmatpush1.msra.mxu0 0.0
  %960 = vmatprep.subr.mxu0 0.0
  %961 = vmatpush1.msra.mxu0 0.0
  %962 = vmatprep.subr.mxu0 0.0
  %963 = vmatpush1.msra.mxu0 0.0
  %964 = vmatprep.subr.mxu0 0.0
  %965 = vmatpush1.msra.mxu0 0.0
  %966 = vmatprep.subr.mxu0 0.0
  %967 = vmatpush1.msra.mxu0 0.0
  %968 = vmatprep.mubr.f32.mxu0 %v902
  %969 = vmatmul.mubr.f32.gmra.mrb[0].mxu0 %v899
  %v970 = vpop.f32.mrb[0].mxu0
  %v971 = vadd.f32 0.0, %v970
  %v972 = vpop.f32.mrb[0].mxu0
  %v973 = vadd.f32 0.0, %v972
  %974 = vdwg.mxu0
  %v976 = vsel %vm173, %v830, 0
  %978 = vmatprep.subr.mxu0 %v20
  %979 = vmatpush1.msra.mxu0 %v19
  %980 = vmatprep.subr.mxu0 %v22
  %981 = vmatpush1.msra.mxu0 %v21
  %982 = vmatprep.subr.mxu0 %v24
  %983 = vmatpush1.msra.mxu0 %v23
  %984 = vmatprep.subr.mxu0 %v26
  %985 = vmatpush1.msra.mxu0 %v25
  %986 = vmatprep.subr.mxu0 %v28
  %987 = vmatpush1.msra.mxu0 %v27
  %988 = vmatprep.subr.mxu0 %v30
  %989 = vmatpush1.msra.mxu0 %v29
  %990 = vmatprep.subr.mxu0 %v32
  %991 = vmatpush1.msra.mxu0 %v31
  %992 = vmatprep.subr.mxu0 %v34
  %993 = vmatpush1.msra.mxu0 %v33
  %994 = vmatprep.subr.mxu0 %v36
  %995 = vmatpush1.msra.mxu0 %v35
  %996 = vmatprep.subr.mxu0 %v38
  %997 = vmatpush1.msra.mxu0 %v37
  %998 = vmatprep.subr.mxu0 %v40
  %999 = vmatpush1.msra.mxu0 %v39
  %1000 = vmatprep.subr.mxu0 %v42
  %1001 = vmatpush1.msra.mxu0 %v41
  %1002 = vmatprep.subr.mxu0 %v44
  %1003 = vmatpush1.msra.mxu0 %v43
  %1004 = vmatprep.subr.mxu0 %v46
  %1005 = vmatpush1.msra.mxu0 %v45
  %1006 = vmatprep.subr.mxu0 %v48
  %1007 = vmatpush1.msra.mxu0 %v47
  %1008 = vmatprep.subr.mxu0 %v50
  %1009 = vmatpush1.msra.mxu0 %v49
  %1010 = vmatprep.subr.mxu0 %v52
  %1011 = vmatpush1.msra.mxu0 %v51
  %1012 = vmatprep.subr.mxu0 %v54
  %1013 = vmatpush1.msra.mxu0 %v53
  %1014 = vmatprep.subr.mxu0 %v56
  %1015 = vmatpush1.msra.mxu0 %v55
  %1016 = vmatprep.subr.mxu0 %v58
  %1017 = vmatpush1.msra.mxu0 %v57
  %1018 = vmatprep.subr.mxu0 0.0
  %1019 = vmatpush1.msra.mxu0 0.0
  %1020 = vmatprep.subr.mxu0 0.0
  %1021 = vmatpush1.msra.mxu0 0.0
  %1022 = vmatprep.subr.mxu0 0.0
  %1023 = vmatpush1.msra.mxu0 0.0
  %1024 = vmatprep.subr.mxu0 0.0
  %1025 = vmatpush1.msra.mxu0 0.0
  %1026 = vmatprep.subr.mxu0 0.0
  %1027 = vmatpush1.msra.mxu0 0.0
  %1028 = vmatprep.subr.mxu0 0.0
  %1029 = vmatpush1.msra.mxu0 0.0
  %1030 = vmatprep.subr.mxu0 0.0
  %1031 = vmatpush1.msra.mxu0 0.0
  %1032 = vmatprep.subr.mxu0 0.0
  %1033 = vmatpush1.msra.mxu0 0.0
  %1034 = vmatprep.subr.mxu0 0.0
  %1035 = vmatpush1.msra.mxu0 0.0
  %1036 = vmatprep.subr.mxu0 0.0
  %1037 = vmatpush1.msra.mxu0 0.0
  %1038 = vmatprep.subr.mxu0 0.0
  %1039 = vmatpush1.msra.mxu0 0.0
  %1040 = vmatprep.subr.mxu0 0.0
  %1041 = vmatpush1.msra.mxu0 0.0
  %1042 = vmatprep.mubr.f32.mxu0 %v976
  %1043 = vmatmul.mubr.f32.gmra.mrb[0].mxu0 %v829
  %v1044 = vpop.f32.mrb[0].mxu0
  %v1045 = vadd.f32 %v971, %v1044
  %v1046 = vpop.f32.mrb[0].mxu0
  %v1047 = vadd.f32 %v973, %v1046
  %1048 = vdwg.mxu0
  %v1049 = vlaneseq
  %v1050 = vshrl.u32 %v1049, 7
  %v1051 = vsub.s32 2, %v1050
  %v1052 = vrot.slane %v119, %v1051
  %v1053 = vlaneseq
  %v1054 = vshrl.u32 %v1053, 7
  %v1055 = vsub.s32 2, %v1054
  %v1056 = vrot.slane %v120, %v1055
  %v1057 = vadd.f32 %v1045, %v1052
  %v1058 = vadd.f32 %v1047, %v1056
  %v1059 = vmax.f32 %v1057, 0.0
  %v1060 = vmax.f32 %v1058, 0.0
  %v1061 = vlaneseq
  %v1062 = vshrl.u32 %v1061, 7
  %v1063 = vsub.s32 3, %v1062
  %v1064 = vrot.slane %v119, %v1063
  %v1066 = vsel %vm173, %v1060, 0
  %1068 = vmatprep.subr.mxu0 0.0
  %1069 = vmatpush1.msra.mxu0 %v99
  %1070 = vmatprep.subr.mxu0 0.0
  %1071 = vmatpush1.msra.mxu0 %v100
  %1072 = vmatprep.subr.mxu0 0.0
  %1073 = vmatpush1.msra.mxu0 %v101
  %1074 = vmatprep.subr.mxu0 0.0
  %1075 = vmatpush1.msra.mxu0 %v102
  %1076 = vmatprep.subr.mxu0 0.0
  %1077 = vmatpush1.msra.mxu0 %v103
  %1078 = vmatprep.subr.mxu0 0.0
  %1079 = vmatpush1.msra.mxu0 %v104
  %1080 = vmatprep.subr.mxu0 0.0
  %1081 = vmatpush1.msra.mxu0 %v105
  %1082 = vmatprep.subr.mxu0 0.0
  %1083 = vmatpush1.msra.mxu0 %v106
  %1084 = vmatprep.subr.mxu0 0.0
  %1085 = vmatpush1.msra.mxu0 %v107
  %1086 = vmatprep.subr.mxu0 0.0
  %1087 = vmatpush1.msra.mxu0 %v108
  %1088 = vmatprep.subr.mxu0 0.0
  %1089 = vmatpush1.msra.mxu0 %v109
  %1090 = vmatprep.subr.mxu0 0.0
  %1091 = vmatpush1.msra.mxu0 %v110
  %1092 = vmatprep.subr.mxu0 0.0
  %1093 = vmatpush1.msra.mxu0 %v111
  %1094 = vmatprep.subr.mxu0 0.0
  %1095 = vmatpush1.msra.mxu0 %v112
  %1096 = vmatprep.subr.mxu0 0.0
  %1097 = vmatpush1.msra.mxu0 %v113
  %1098 = vmatprep.subr.mxu0 0.0
  %1099 = vmatpush1.msra.mxu0 %v114
  %1100 = vmatprep.subr.mxu0 0.0
  %1101 = vmatpush1.msra.mxu0 %v115
  %1102 = vmatprep.subr.mxu0 0.0
  %1103 = vmatpush1.msra.mxu0 %v116
  %1104 = vmatprep.subr.mxu0 0.0
  %1105 = vmatpush1.msra.mxu0 %v117
  %1106 = vmatprep.subr.mxu0 0.0
  %1107 = vmatpush1.msra.mxu0 %v118
  %1108 = vmatprep.subr.mxu0 0.0
  %1109 = vmatpush1.msra.mxu0 0.0
  %1110 = vmatprep.subr.mxu0 0.0
  %1111 = vmatpush1.msra.mxu0 0.0
  %1112 = vmatprep.subr.mxu0 0.0
  %1113 = vmatpush1.msra.mxu0 0.0
  %1114 = vmatprep.subr.mxu0 0.0
  %1115 = vmatpush1.msra.mxu0 0.0
  %1116 = vmatprep.subr.mxu0 0.0
  %1117 = vmatpush1.msra.mxu0 0.0
  %1118 = vmatprep.subr.mxu0 0.0
  %1119 = vmatpush1.msra.mxu0 0.0
  %1120 = vmatprep.subr.mxu0 0.0
  %1121 = vmatpush1.msra.mxu0 0.0
  %1122 = vmatprep.subr.mxu0 0.0
  %1123 = vmatpush1.msra.mxu0 0.0
  %1124 = vmatprep.subr.mxu0 0.0
  %1125 = vmatpush1.msra.mxu0 0.0
  %1126 = vmatprep.subr.mxu0 0.0
  %1127 = vmatpush1.msra.mxu0 0.0
  %1128 = vmatprep.subr.mxu0 0.0
  %1129 = vmatpush1.msra.mxu0 0.0
  %1130 = vmatprep.subr.mxu0 0.0
  %1131 = vmatpush1.msra.mxu0 0.0
  %1132 = vmatprep.mubr.f32.mxu0 %v1066
  %1133 = vmatmul.mubr.f32.gmra.mrb[0].mxu0 %v1059
  %v1134 = vpop.f32.mrb[0].mxu0
  %v1135 = vadd.f32 %v1064, %v1134
  %v1136 = vpop.f32.mrb[0].mxu0
  %1137 = vdwg.mxu0
  %v1138 = vxor.u32 %v1135, 2147483648
  %v1139 = vmul.f32 %v1138, 1.442695
  %v1140 = vpow.pop %v1139
  %v1141 = vadd.f32 %v1140, 1.0
  %v1142 = vrcp.pop %v1141
  %v1143 = vmul.f32 1.0, %v1142
  %v1144 = vsel %vm173, %v403, 0.0
  %1145 = vadd.xlane.f32.xlu0 %v1144
  %v1146 = vpop.xlane.xlu0 %1145
  %v1147 = vsel %vm173, %v409, 0.0
  %1148 = vadd.xlane.f32.xlu0 %v1147
  %v1149 = vpop.xlane.xlu0 %1148
  %v1150 = vsel %vm173, %v415, 0.0
  %1151 = vadd.xlane.f32.xlu0 %v1150
  %v1152 = vpop.xlane.xlu0 %1151
  %v1153 = vsel %vm173, %v421, 0.0
  %1154 = vadd.xlane.f32.xlu0 %v1153
  %v1155 = vpop.xlane.xlu0 %1154
  %v1156 = vsel %vm173, %v427, 0.0
  %1157 = vadd.xlane.f32.xlu0 %v1156
  %v1158 = vpop.xlane.xlu0 %1157
  %v1159 = vsel %vm173, %v433, 0.0
  %1160 = vadd.xlane.f32.xlu0 %v1159
  %v1161 = vpop.xlane.xlu0 %1160
  %v1162 = vsel %vm173, %v439, 0.0
  %1163 = vadd.xlane.f32.xlu0 %v1162
  %v1164 = vpop.xlane.xlu0 %1163
  %v1165 = vsel %vm173, %v445, 0.0
  %1166 = vadd.xlane.f32.xlu0 %v1165
  %v1167 = vpop.xlane.xlu0 %1166
  %v1168 = vrcp.pop 32.0
  %v1169 = vmul.f32 %v1146, %v1168
  %v1170 = vmul.f32 %v1149, %v1168
  %v1171 = vmul.f32 %v1152, %v1168
  %v1172 = vmul.f32 %v1155, %v1168
  %v1173 = vmul.f32 %v1158, %v1168
  %v1174 = vmul.f32 %v1161, %v1168
  %v1175 = vmul.f32 %v1164, %v1168
  %v1176 = vmul.f32 %v1167, %v1168
  %v1177 = vxor.u32 %v1169, 2147483648
  %v1178 = vxor.u32 %v1170, 2147483648
  %v1179 = vxor.u32 %v1171, 2147483648
  %v1180 = vxor.u32 %v1172, 2147483648
  %v1181 = vxor.u32 %v1173, 2147483648
  %v1182 = vxor.u32 %v1174, 2147483648
  %v1183 = vxor.u32 %v1175, 2147483648
  %v1184 = vxor.u32 %v1176, 2147483648
  %v1185 = vmul.f32 %v1177, 1.442695
  %v1186 = vpow.pop %v1185
  %v1187 = vmul.f32 %v1178, 1.442695
  %v1188 = vpow.pop %v1187
  %v1189 = vmul.f32 %v1179, 1.442695
  %v1190 = vpow.pop %v1189
  %v1191 = vmul.f32 %v1180, 1.442695
  %v1192 = vpow.pop %v1191
  %v1193 = vmul.f32 %v1181, 1.442695
  %v1194 = vpow.pop %v1193
  %v1195 = vmul.f32 %v1182, 1.442695
  %v1196 = vpow.pop %v1195
  %v1197 = vmul.f32 %v1183, 1.442695
  %v1198 = vpow.pop %v1197
  %v1199 = vmul.f32 %v1184, 1.442695
  %v1200 = vpow.pop %v1199
  %v1201 = vadd.f32 %v1186, 1.0
  %v1202 = vadd.f32 %v1188, 1.0
  %v1203 = vadd.f32 %v1190, 1.0
  %v1204 = vadd.f32 %v1192, 1.0
  %v1205 = vadd.f32 %v1194, 1.0
  %v1206 = vadd.f32 %v1196, 1.0
  %v1207 = vadd.f32 %v1198, 1.0
  %v1208 = vadd.f32 %v1200, 1.0
  %v1209 = vrcp.pop %v1201
  %v1210 = vmul.f32 1.0, %v1209
  %v1211 = vrcp.pop %v1202
  %v1212 = vmul.f32 1.0, %v1211
  %v1213 = vrcp.pop %v1203
  %v1214 = vmul.f32 1.0, %v1213
  %v1215 = vrcp.pop %v1204
  %v1216 = vmul.f32 1.0, %v1215
  %v1217 = vrcp.pop %v1205
  %v1218 = vmul.f32 1.0, %v1217
  %v1219 = vrcp.pop %v1206
  %v1220 = vmul.f32 1.0, %v1219
  %v1221 = vrcp.pop %v1207
  %v1222 = vmul.f32 1.0, %v1221
  %v1223 = vrcp.pop %v1208
  %v1224 = vmul.f32 1.0, %v1223
  %v1225 = vlaneseq
  %v1226 = vshrl.u32 %v1225, 7
  %v1227 = vsub.s32 0, %v1226
  %v1228 = vrot.slane %v1143, %v1227
  %v1229 = vmul.f32 %v1228, %v403
  %v1230 = vmul.f32 %v1228, %v409
  %v1231 = vmul.f32 %v1228, %v415
  %v1232 = vmul.f32 %v1228, %v421
  %v1233 = vmul.f32 %v1228, %v427
  %v1234 = vmul.f32 %v1228, %v433
  %v1235 = vmul.f32 %v1228, %v439
  %v1236 = vmul.f32 %v1228, %v445
  %v1237 = vmul.f32 %v1229, %v1210
  %v1238 = vmul.f32 %v1230, %v1212
  %v1239 = vmul.f32 %v1231, %v1214
  %v1240 = vmul.f32 %v1232, %v1216
  %v1241 = vmul.f32 %v1233, %v1218
  %v1242 = vmul.f32 %v1234, %v1220
  %v1243 = vmul.f32 %v1235, %v1222
  %v1244 = vmul.f32 %v1236, %v1224
  %1245 = vxpose.xlu0.b32.start [1/16] %v1237, 128
  %1246 = vxpose.xlu0.b32.cont [2/16] %v1238, 128
  %1247 = vxpose.xlu0.b32.cont [3/16] %v1239, 128
  %1248 = vxpose.xlu0.b32.cont [4/16] %v1240, 128
  %1249 = vxpose.xlu0.b32.cont [5/16] %v1241, 128
  %1250 = vxpose.xlu0.b32.cont [6/16] %v1242, 128
  %1251 = vxpose.xlu0.b32.cont [7/16] %v1243, 128
  %1252 = vxpose.xlu0.b32.cont [8/16] %v1244, 128
  %1253 = vxpose.xlu0.b32.cont [9/16] 0.0, 128
  %1254 = vxpose.xlu0.b32.cont [10/16] 0.0, 128
  %1255 = vxpose.xlu0.b32.cont [11/16] 0.0, 128
  %1256 = vxpose.xlu0.b32.cont [12/16] 0.0, 128
  %1257 = vxpose.xlu0.b32.cont [13/16] 0.0, 128
  %1258 = vxpose.xlu0.b32.cont [14/16] 0.0, 128
  %1259 = vxpose.xlu0.b32.cont [15/16] 0.0, 128
  %1260 = vxpose.xlu0.b32.end [16/16] 0.0, 128
  %v1261 = vpop.trf.xlu0
  %v1262 = vpop.trf.xlu0
  %v1263 = vpop.trf.xlu0
  %v1264 = vpop.trf.xlu0
  %v1265 = vpop.trf.xlu0
  %v1266 = vpop.trf.xlu0
  %v1267 = vpop.trf.xlu0
  %v1268 = vpop.trf.xlu0
  %v1269 = vpop.trf.xlu0
  %v1270 = vpop.trf.xlu0
  %v1271 = vpop.trf.xlu0
  %v1272 = vpop.trf.xlu0
  %v1273 = vpop.trf.xlu0
  %v1274 = vpop.trf.xlu0
  %v1275 = vpop.trf.xlu0
  %v1276 = vpop.trf.xlu0
  %v1277 = vsel %vm173, %v709, 0.0
  %1278 = vadd.xlane.f32.xlu0 %v1277
  %v1279 = vpop.xlane.xlu0 %1278
  %v1280 = vsel %vm173, %v715, 0.0
  %1281 = vadd.xlane.f32.xlu0 %v1280
  %v1282 = vpop.xlane.xlu0 %1281
  %v1283 = vsel %vm173, %v721, 0.0
  %1284 = vadd.xlane.f32.xlu0 %v1283
  %v1285 = vpop.xlane.xlu0 %1284
  %v1286 = vsel %vm173, %v727, 0.0
  %1287 = vadd.xlane.f32.xlu0 %v1286
  %v1288 = vpop.xlane.xlu0 %1287
  %v1289 = vsel %vm173, %v733, 0.0
  %1290 = vadd.xlane.f32.xlu0 %v1289
  %v1291 = vpop.xlane.xlu0 %1290
  %v1292 = vsel %vm173, %v739, 0.0
  %1293 = vadd.xlane.f32.xlu0 %v1292
  %v1294 = vpop.xlane.xlu0 %1293
  %v1295 = vsel %vm173, %v745, 0.0
  %1296 = vadd.xlane.f32.xlu0 %v1295
  %v1297 = vpop.xlane.xlu0 %1296
  %v1298 = vsel %vm173, %v751, 0.0
  %1299 = vadd.xlane.f32.xlu0 %v1298
  %v1300 = vpop.xlane.xlu0 %1299
  %v1301 = vmul.f32 %v1279, %v1168
  %v1302 = vmul.f32 %v1282, %v1168
  %v1303 = vmul.f32 %v1285, %v1168
  %v1304 = vmul.f32 %v1288, %v1168
  %v1305 = vmul.f32 %v1291, %v1168
  %v1306 = vmul.f32 %v1294, %v1168
  %v1307 = vmul.f32 %v1297, %v1168
  %v1308 = vmul.f32 %v1300, %v1168
  %v1309 = vxor.u32 %v1301, 2147483648
  %v1310 = vxor.u32 %v1302, 2147483648
  %v1311 = vxor.u32 %v1303, 2147483648
  %v1312 = vxor.u32 %v1304, 2147483648
  %v1313 = vxor.u32 %v1305, 2147483648
  %v1314 = vxor.u32 %v1306, 2147483648
  %v1315 = vxor.u32 %v1307, 2147483648
  %v1316 = vxor.u32 %v1308, 2147483648
  %v1317 = vmul.f32 %v1309, 1.442695
  %v1318 = vpow.pop %v1317
  %v1319 = vmul.f32 %v1310, 1.442695
  %v1320 = vpow.pop %v1319
  %v1321 = vmul.f32 %v1311, 1.442695
  %v1322 = vpow.pop %v1321
  %v1323 = vmul.f32 %v1312, 1.442695
  %v1324 = vpow.pop %v1323
  %v1325 = vmul.f32 %v1313, 1.442695
  %v1326 = vpow.pop %v1325
  %v1327 = vmul.f32 %v1314, 1.442695
  %v1328 = vpow.pop %v1327
  %v1329 = vmul.f32 %v1315, 1.442695
  %v1330 = vpow.pop %v1329
  %v1331 = vmul.f32 %v1316, 1.442695
  %v1332 = vpow.pop %v1331
  %v1333 = vadd.f32 %v1318, 1.0
  %v1334 = vadd.f32 %v1320, 1.0
  %v1335 = vadd.f32 %v1322, 1.0
  %v1336 = vadd.f32 %v1324, 1.0
  %v1337 = vadd.f32 %v1326, 1.0
  %v1338 = vadd.f32 %v1328, 1.0
  %v1339 = vadd.f32 %v1330, 1.0
  %v1340 = vadd.f32 %v1332, 1.0
  %v1341 = vrcp.pop %v1333
  %v1342 = vmul.f32 1.0, %v1341
  %v1343 = vrcp.pop %v1334
  %v1344 = vmul.f32 1.0, %v1343
  %v1345 = vrcp.pop %v1335
  %v1346 = vmul.f32 1.0, %v1345
  %v1347 = vrcp.pop %v1336
  %v1348 = vmul.f32 1.0, %v1347
  %v1349 = vrcp.pop %v1337
  %v1350 = vmul.f32 1.0, %v1349
  %v1351 = vrcp.pop %v1338
  %v1352 = vmul.f32 1.0, %v1351
  %v1353 = vrcp.pop %v1339
  %v1354 = vmul.f32 1.0, %v1353
  %v1355 = vrcp.pop %v1340
  %v1356 = vmul.f32 1.0, %v1355
  %v1357 = vlaneseq
  %v1358 = vshrl.u32 %v1357, 7
  %v1359 = vsub.s32 1, %v1358
  %v1360 = vrot.slane %v1143, %v1359
  %v1361 = vmul.f32 %v1360, %v709
  %v1362 = vmul.f32 %v1360, %v715
  %v1363 = vmul.f32 %v1360, %v721
  %v1364 = vmul.f32 %v1360, %v727
  %v1365 = vmul.f32 %v1360, %v733
  %v1366 = vmul.f32 %v1360, %v739
  %v1367 = vmul.f32 %v1360, %v745
  %v1368 = vmul.f32 %v1360, %v751
  %v1369 = vmul.f32 %v1361, %v1342
  %v1370 = vmul.f32 %v1362, %v1344
  %v1371 = vmul.f32 %v1363, %v1346
  %v1372 = vmul.f32 %v1364, %v1348
  %v1373 = vmul.f32 %v1365, %v1350
  %v1374 = vmul.f32 %v1366, %v1352
  %v1375 = vmul.f32 %v1367, %v1354
  %v1376 = vmul.f32 %v1368, %v1356
  %1377 = vxpose.xlu0.b32.start [1/16] %v1369, 128
  %1378 = vxpose.xlu0.b32.cont [2/16] %v1370, 128
  %1379 = vxpose.xlu0.b32.cont [3/16] %v1371, 128
  %1380 = vxpose.xlu0.b32.cont [4/16] %v1372, 128
  %1381 = vxpose.xlu0.b32.cont [5/16] %v1373, 128
  %1382 = vxpose.xlu0.b32.cont [6/16] %v1374, 128
  %1383 = vxpose.xlu0.b32.cont [7/16] %v1375, 128
  %1384 = vxpose.xlu0.b32.cont [8/16] %v1376, 128
  %1385 = vxpose.xlu0.b32.cont [9/16] 0.0, 128
  %1386 = vxpose.xlu0.b32.cont [10/16] 0.0, 128
  %1387 = vxpose.xlu0.b32.cont [11/16] 0.0, 128
  %1388 = vxpose.xlu0.b32.cont [12/16] 0.0, 128
  %1389 = vxpose.xlu0.b32.cont [13/16] 0.0, 128
  %1390 = vxpose.xlu0.b32.cont [14/16] 0.0, 128
  %1391 = vxpose.xlu0.b32.cont [15/16] 0.0, 128
  %1392 = vxpose.xlu0.b32.end [16/16] 0.0, 128
  %v1393 = vpop.trf.xlu0
  %v1394 = vpop.trf.xlu0
  %v1395 = vpop.trf.xlu0
  %v1396 = vpop.trf.xlu0
  %v1397 = vpop.trf.xlu0
  %v1398 = vpop.trf.xlu0
  %v1399 = vpop.trf.xlu0
  %v1400 = vpop.trf.xlu0
  %v1401 = vpop.trf.xlu0
  %v1402 = vpop.trf.xlu0
  %v1403 = vpop.trf.xlu0
  %v1404 = vpop.trf.xlu0
  %v1405 = vpop.trf.xlu0
  %v1406 = vpop.trf.xlu0
  %v1407 = vpop.trf.xlu0
  %v1408 = vpop.trf.xlu0
  %vm1409 = vcmask 523264
  %1410 = vst.msk [vmem:[%s2] sm:$0xff] %vm1409, %v1261
  %1411 = vst.msk [vmem:[%s2 + $0x8] sm:$0xff] %vm1409, %v1262
  %1412 = vst.msk [vmem:[%s2 + $0x10] sm:$0xff] %vm1409, %v1263
  %1413 = vst.msk [vmem:[%s2 + $0x18] sm:$0xff] %vm1409, %v1264
  %1414 = vst.msk [vmem:[%s2 + $0x20] sm:$0xff] %vm1409, %v1393
  %1415 = vst.msk [vmem:[%s2 + $0x28] sm:$0xff] %vm1409, %v1394
  %1416 = vst.msk [vmem:[%s2 + $0x30] sm:$0xff] %vm1409, %v1395
  %1417 = vst.msk [vmem:[%s2 + $0x38] sm:$0xff] %vm1409, %v1396
  // Predicated region
  $region10: #{multi_path_attn.1} parent=0 // pred_check
    _
  $region11: #{multi_path_attn.1} parent=0 // pred_check_branch
    %1419 = sbr.rel (0) target = $region13
  $region12: #{multi_path_attn.1} parent=0 // pred_region
    _
  $region13: #{multi_path_attn.1} parent=0 // pred_fallthru
    _
  // Predicated region
  $region14: #{multi_path_attn.1} parent=0 // pred_check
    _
  $region15: #{multi_path_attn.1} parent=0 // pred_check_branch
    %1421 = sbr.rel (0) target = $region17
  $region16: #{multi_path_attn.1} parent=0 // pred_region
    _
  $region17: #{multi_path_attn.1} parent=0 // pred_fallthru
    _

</llo_original>
